<compile_context>
chip_gen: v6e
topology: v6e:2x2x1
jax: 0.10.0
libtpu: 0.0.40
codegen_flags: <defaults>
</compile_context>

<pallas_src>
import functools
import math

import jax
import jax.numpy as jnp
from jax.experimental import pallas as pl
from jax.experimental.pallas import tpu as pltpu

_F32 = jnp.float32
_BF16 = jnp.bfloat16
_LN_EPS = 1e-5


# --------------------------------- helpers ---------------------------------- #
def _largest_divisor_tile(n, cap):
    """Largest divisor of n that is <= cap (exact grids, no padded blocks)."""
    cap = max(1, min(n, cap))
    for t in range(cap, 0, -1):
        if n % t == 0:
            return t
    return n


def _bytes(shape, dtype):
    return int(math.prod(shape)) * jnp.dtype(dtype).itemsize


def _vmem_limit(block_bytes, extra_bytes=0):
    # double-buffered pipelined blocks + in-kernel intermediates + headroom,
    # clamped so the request never exceeds v7x's 64 MiB physical VMEM.
    total = 2 * int(block_bytes) + int(extra_bytes) + (2 << 20)
    return int(min(max(total, 4 << 20), 64 << 20))


# --------------------------- fused attention block -------------------------- #
def _mha_addnorm_kernel(vl_ref, xq_ref, xkv_ref, wq_ref, bq_ref, wkv_ref,
                        bkv_ref, wo_ref, bo_ref, g_ref, bt_ref, o_ref, *,
                        num_heads, causal, eps):
    """Q/KV proj -> per-head masked softmax attention -> single Wo matmul -> add&LN."""
    b = pl.program_id(0)
    qt = pl.program_id(1)

    xq = xq_ref[0]                               # (tq, H) f32 query tile
    xkv = xkv_ref[0]                             # (Sk, H) f32 full key/value rows
    tq, hidden = xq.shape
    sk = xkv.shape[0]
    d = hidden // num_heads
    scale = 1.0 / math.sqrt(d)

    # Projections: pre-cast bf16 weights on the MXU, f32 accumulation.
    q = jnp.dot(xq.astype(_BF16), wq_ref[...],
                preferred_element_type=_F32) + bq_ref[...]          # (tq, H)
    kv = jnp.dot(xkv.astype(_BF16), wkv_ref[...],
                 preferred_element_type=_F32) + bkv_ref[...]        # (Sk, 2H)
    k = kv[:, :hidden]
    v = kv[:, hidden:]

    # Masks built in-kernel from iota + SMEM scalar (no (B, S) mask tensor in HBM).
    q_idx = qt * tq + jax.lax.broadcasted_iota(jnp.int32, (tq, sk), 0)
    k_idx = jax.lax.broadcasted_iota(jnp.int32, (tq, sk), 1)
    if causal:
        mask = k_idx <= q_idx
    else:
        mask = k_idx < vl_ref[b]

    lane_aligned = (d % 128 == 0)                # production head widths
    if lane_aligned:
        head_ctx = []
    else:
        # TODO(synk): heads are also batchable as one 'hqd,hkd->hqk' einsum; kept
        # as a static loop here to stay layout-safe for lane-unaligned head dims.
        lane = jax.lax.broadcasted_iota(jnp.int32, (sk, hidden), 1)
        ctx = jnp.zeros((tq, hidden), _F32)

    for h_i in range(num_heads):                 # static head loop
        lo = h_i * d
        qh = q[:, lo:lo + d]
        kh = k[:, lo:lo + d]
        s = jnp.einsum("qd,kd->qk", qh.astype(_BF16), kh.astype(_BF16),
                       preferred_element_type=_F32) * scale
        s = jnp.where(mask, s, -1e9)
        s = s - jnp.max(s, axis=-1, keepdims=True)
        p = jnp.exp(s)
        p = p * pl.reciprocal(jnp.sum(p, axis=-1, keepdims=True), approx=True)
        if lane_aligned:
            vh = v[:, lo:lo + d]
            head_ctx.append(jnp.dot(p.astype(_BF16), vh.astype(_BF16),
                                    preferred_element_type=_F32))
        else:
            # Lane-unaligned head width (toy shapes): place this head's context in
            # its own columns by masking V, avoiding a minor-dim concatenate.
            vh = jnp.where((lane >= lo) & (lane < lo + d), v, 0.0)
            ctx = ctx + jnp.dot(p.astype(_BF16), vh.astype(_BF16),
                                preferred_element_type=_F32)

    if lane_aligned:
        ctx = jnp.concatenate(head_ctx, axis=-1) if num_heads > 1 else head_ctx[0]

    # ONE full-width output projection (K = H) -> full MXU contraction fill.
    attn = jnp.dot(ctx.astype(_BF16), wo_ref[...],
                   preferred_element_type=_F32) + bo_ref[...]

    # residual + LayerNorm (f32 elementwise; EUP rsqrt).
    z = xq + attn
    mean = jnp.mean(z, axis=-1, keepdims=True)
    var = jnp.mean(jnp.square(z - mean), axis=-1, keepdims=True)
    zn = (z - mean) * jax.lax.rsqrt(var + eps)
    o_ref[0] = (zn * g_ref[...] + bt_ref[...]).astype(o_ref.dtype)


def mha_addnorm(x_q, x_kv, valid_lens, prm, gamma, beta, num_heads,
                causal=False, q_tile_cap=256):
    """x_q: (B, Sq, H); x_kv: (B, Sk, H); valid_lens: (B,) int32."""
    b, sq, h = x_q.shape
    sk = x_kv.shape[1]
    tq = _largest_divisor_tile(sq, q_tile_cap)

    # Pre-cast weights to bf16 once (halves weight DMA / VMEM); biases & LN stay f32.
    wq = prm["wq"].astype(_BF16)
    wkv = prm["wkv"].astype(_BF16)
    wo = prm["wo"].astype(_BF16)
    bq = prm["bq"].reshape(1, h).astype(_F32)
    bkv = prm["bkv"].reshape(1, 2 * h).astype(_F32)
    bo = prm["bo"].reshape(1, h).astype(_F32)
    g = gamma.reshape(1, h).astype(_F32)
    bt = beta.reshape(1, h).astype(_F32)

    def const2d(arr):
        return pl.BlockSpec(arr.shape, lambda bi, qi, vl: (0, 0))

    in_specs = [
        pl.BlockSpec((1, tq, h), lambda bi, qi, vl: (bi, qi, 0)),   # query tile
        pl.BlockSpec((1, sk, h), lambda bi, qi, vl: (bi, 0, 0)),    # full K/V rows
        const2d(wq), const2d(bq), const2d(wkv), const2d(bkv),
        const2d(wo), const2d(bo), const2d(g), const2d(bt),
    ]
    out_spec = pl.BlockSpec((1, tq, h), lambda bi, qi, vl: (bi, qi, 0))

    block_bytes = (2 * _bytes((1, tq, h), _F32) + _bytes((1, sk, h), _F32) +
                   _bytes(wq.shape, _BF16) + _bytes(wkv.shape, _BF16) +
                   _bytes(wo.shape, _BF16) + _bytes(bq.shape, _F32) +
                   _bytes(bkv.shape, _F32) + _bytes(bo.shape, _F32) +
                   _bytes(g.shape, _F32) + _bytes(bt.shape, _F32))
    intermediates = (_bytes((sk, 2 * h), _F32) + 2 * _bytes((tq, h), _F32) +
                     2 * _bytes((tq, sk), _F32))

    d = h // num_heads
    flops = b * (2 * sq * h * h + 2 * sk * h * 2 * h +
                 4 * num_heads * sq * sk * d + 2 * sq * h * h)
    cost = pl.CostEstimate(
        flops=int(flops),
        transcendentals=int(b * (num_heads * sq * sk + sq)),
        bytes_accessed=int(b * (2 * _bytes((sq, h), _F32) + _bytes((sk, h), _F32))
                           + _bytes(wq.shape, _BF16) + _bytes(wkv.shape, _BF16)
                           + _bytes(wo.shape, _BF16)))

    grid_spec = pltpu.PrefetchScalarGridSpec(
        num_scalar_prefetch=1,
        grid=(b, sq // tq),
        in_specs=in_specs,
        out_specs=out_spec,
    )
    return pl.pallas_call(
        functools.partial(_mha_addnorm_kernel, num_heads=num_heads,
                          causal=causal, eps=_LN_EPS),
        out_shape=jax.ShapeDtypeStruct((b, sq, h), _F32),
        grid_spec=grid_spec,
        compiler_params=pltpu.CompilerParams(
            dimension_semantics=("parallel", "parallel"),
            vmem_limit_bytes=_vmem_limit(block_bytes, intermediates)),
        cost_estimate=cost,
    )(valid_lens.astype(jnp.int32), x_q, x_kv, wq, bq, wkv, bkv, wo, bo, g, bt)


# ------------------------------ fused FFN block ------------------------------ #
def _ffn_addnorm_kernel(x_ref, w1_ref, b1_ref, w2_ref, b2_ref, g_ref, bt_ref,
                        o_ref, acc_ref, *, eps):
    kf = pl.program_id(1)

    @pl.when(kf == 0)
    def _():
        acc_ref[...] = jnp.zeros_like(acc_ref)

    x = x_ref[...]                                                 # (tm, H) f32
    h1 = jnp.dot(x.astype(_BF16), w1_ref[...],
                 preferred_element_type=_F32) + b1_ref[...]        # (tm, tf)
    h1 = jnp.maximum(h1, 0.0)
    acc_ref[...] += jnp.dot(h1.astype(_BF16), w2_ref[...],
                            preferred_element_type=_F32)           # (tm, H)

    @pl.when(kf == pl.num_programs(1) - 1)
    def _():
        z = x + acc_ref[...] + b2_ref[...]
        mean = jnp.mean(z, axis=-1, keepdims=True)
        var = jnp.mean(jnp.square(z - mean), axis=-1, keepdims=True)
        zn = (z - mean) * jax.lax.rsqrt(var + eps)
        o_ref[...] = (zn * g_ref[...] + bt_ref[...]).astype(o_ref.dtype)


def ffn_addnorm(x2d, w1, b1, w2, b2, gamma, beta, *, row_cap=512, ffn_cap=2048):
    m, h = x2d.shape
    f = w1.shape[1]
    tm = _largest_divisor_tile(m, row_cap)
    tf = _largest_divisor_tile(f, ffn_cap)      # FFN hidden dim is K-tiled

    w1b = w1.astype(_BF16)
    w2b = w2.astype(_BF16)
    b1r = b1.reshape(1, f).astype(_F32)
    b2r = b2.reshape(1, h).astype(_F32)
    g = gamma.reshape(1, h).astype(_F32)
    bt = beta.reshape(1, h).astype(_F32)

    in_specs = [
        pl.BlockSpec((tm, h), lambda i, k: (i, 0)),
        pl.BlockSpec((h, tf), lambda i, k: (0, k)),
        pl.BlockSpec((1, tf), lambda i, k: (0, k)),
        pl.BlockSpec((tf, h), lambda i, k: (k, 0)),
        pl.BlockSpec((1, h), lambda i, k: (0, 0)),
        pl.BlockSpec((1, h), lambda i, k: (0, 0)),
        pl.BlockSpec((1, h), lambda i, k: (0, 0)),
    ]
    out_spec = pl.BlockSpec((tm, h), lambda i, k: (i, 0))

    block_bytes = (2 * _bytes((tm, h), _F32) + _bytes((h, tf), _BF16) +
                   _bytes((tf, h), _BF16) + _bytes((1, tf), _F32) +
                   3 * _bytes((1, h), _F32))
    intermediates = _bytes((tm, tf), _F32) + 2 * _bytes((tm, h), _F32)

    cost = pl.CostEstimate(
        flops=int(4 * m * h * f),
        transcendentals=int(m),
        bytes_accessed=int(2 * _bytes((m, h), _F32) + _bytes((h, f), _BF16) +
                           _bytes((f, h), _BF16)))

    return pl.pallas_call(
        functools.partial(_ffn_addnorm_kernel, eps=_LN_EPS),
        out_shape=jax.ShapeDtypeStruct((m, h), _F32),
        grid=(m // tm, f // tf),
        in_specs=in_specs,
        out_specs=out_spec,
        scratch_shapes=[pltpu.VMEM((tm, h), _F32)],
        compiler_params=pltpu.CompilerParams(
            dimension_semantics=("parallel", "arbitrary"),
            vmem_limit_bytes=_vmem_limit(block_bytes, intermediates)),
        cost_estimate=cost,
    )(x2d, w1b, b1r, w2b, b2r, g, bt)


# --------------------------- output (vocab) projection ----------------------- #
def _linear_kernel(x_ref, w_ref, b_ref, o_ref):
    y = jnp.dot(x_ref[...].astype(_BF16), w_ref[...],
                preferred_element_type=_F32) + b_ref[...]
    o_ref[...] = y.astype(o_ref.dtype)


def linear(x2d, w, b, *, row_cap=512, col_cap=2048):
    m, k = x2d.shape
    n = w.shape[1]
    tm = _largest_divisor_tile(m, row_cap)
    tn = _largest_divisor_tile(n, col_cap)      # stream weight column blocks

    wb = w.astype(_BF16)
    br = b.reshape(1, n).astype(_F32)

    block_bytes = (_bytes((tm, k), _F32) + _bytes((k, tn), _BF16) +
                   _bytes((1, tn), _F32) + _bytes((tm, tn), _F32))
    cost = pl.CostEstimate(
        flops=int(2 * m * k * n), transcendentals=0,
        bytes_accessed=int(_bytes((m, k), _F32) + _bytes((k, n), _BF16) +
                           _bytes((m, n), _F32)))

    return pl.pallas_call(
        _linear_kernel,
        out_shape=jax.ShapeDtypeStruct((m, n), _F32),
        grid=(m // tm, n // tn),
        in_specs=[pl.BlockSpec((tm, k), lambda i, j: (i, 0)),
                  pl.BlockSpec((k, tn), lambda i, j: (0, j)),
                  pl.BlockSpec((1, tn), lambda i, j: (0, j))],
        out_specs=pl.BlockSpec((tm, tn), lambda i, j: (i, j)),
        compiler_params=pltpu.CompilerParams(
            dimension_semantics=("parallel", "parallel"),
            vmem_limit_bytes=_vmem_limit(block_bytes, _bytes((tm, tn), _F32))),
        cost_estimate=cost,
    )(x2d, wb, br)


# ------------------------------ model pieces --------------------------------- #
def positional_encoding(seq_len, h):
    pos = jnp.arange(seq_len, dtype=_F32)[:, None]
    i = jnp.arange(0, h, 2, dtype=_F32)[None, :]
    angles = pos / jnp.power(10000.0, i / h)
    pe = jnp.zeros((seq_len, h), _F32)
    pe = pe.at[:, 0::2].set(jnp.sin(angles))
    pe = pe.at[:, 1::2].set(jnp.cos(angles))
    return pe


def encode(enc_x, src_valid_len, p):
    b, s = enc_x.shape
    h = p["H"]
    # TODO(synk): embedding gather + positional encoding stay as plain XLA ops.
    x = p["enc_emb"][enc_x] * math.sqrt(h) + positional_encoding(s, h)[None]
    y = mha_addnorm(x, x, src_valid_len, p["enc_attn"],
                    p["enc_ln1_g"], p["enc_ln1_b"], p["heads"], causal=False)
    z = ffn_addnorm(y.reshape(-1, h), p["enc_ffn_w1"], p["enc_ffn_b1"],
                    p["enc_ffn_w2"], p["enc_ffn_b2"],
                    p["enc_ln2_g"], p["enc_ln2_b"]).reshape(b, s, h)
    return z


def decode(dec_x, enc_out, src_valid_len, p):
    b, s = dec_x.shape
    h = p["H"]
    x = p["dec_emb"][dec_x] * math.sqrt(h) + positional_encoding(s, h)[None]

    # training-mode decoder self-attention: causal mask built in-kernel
    y = mha_addnorm(x, x, src_valid_len, p["dec_self_attn"],
                    p["dec_ln1_g"], p["dec_ln1_b"], p["heads"], causal=True)
    z = mha_addnorm(y, enc_out, src_valid_len, p["dec_cross_attn"],
                    p["dec_ln2_g"], p["dec_ln2_b"], p["heads"], causal=False)
    w = ffn_addnorm(z.reshape(-1, h), p["dec_ffn_w1"], p["dec_ffn_b1"],
                    p["dec_ffn_w2"], p["dec_ffn_b2"],
                    p["dec_ln3_g"], p["dec_ln3_b"])
    logits = linear(w, p["out_w"], p["out_b"])
    return logits.reshape(b, s, -1)


def encoder_decoder_forward(enc_x, dec_x, src_valid_len, params):
    """EncoderDecoder.forward: decoder(dec_X, decoder.init_state(encoder(enc_X)))[0]."""
    enc_out = encode(enc_x, src_valid_len, params)
    return decode(dec_x, enc_out, src_valid_len, params)


# -------------------------------- param init --------------------------------- #
def init_params(key, vocab_src, vocab_tgt, h, ffn, heads):
    keys = iter(jax.random.split(key, 64))

    def lin(fin, fout):
        return (jax.random.normal(next(keys), (fin, fout), _F32) * 0.02,
                jnp.zeros((fout,), _F32))

    def mha_params():
        wq, bq = lin(h, h)
        wkv, bkv = lin(h, 2 * h)     # fused Wk|Wv
        wo, bo = lin(h, h)
        return dict(wq=wq, bq=bq, wkv=wkv, bkv=bkv, wo=wo, bo=bo)

    p = {"H": h, "heads": heads}
    p["enc_emb"] = jax.random.normal(next(keys), (vocab_src, h), _F32) * 0.02
    p["dec_emb"] = jax.random.normal(next(keys), (vocab_tgt, h), _F32) * 0.02

    p["enc_attn"] = mha_params()
    p["enc_ffn_w1"], p["enc_ffn_b1"] = lin(h, ffn)
    p["enc_ffn_w2"], p["enc_ffn_b2"] = lin(ffn, h)
    p["enc_ln1_g"], p["enc_ln1_b"] = jnp.ones((h,), _F32), jnp.zeros((h,), _F32)
    p["enc_ln2_g"], p["enc_ln2_b"] = jnp.ones((h,), _F32), jnp.zeros((h,), _F32)

    p["dec_self_attn"] = mha_params()
    p["dec_cross_attn"] = mha_params()
    p["dec_ffn_w1"], p["dec_ffn_b1"] = lin(h, ffn)
    p["dec_ffn_w2"], p["dec_ffn_b2"] = lin(ffn, h)
    p["dec_ln1_g"], p["dec_ln1_b"] = jnp.ones((h,), _F32), jnp.zeros((h,), _F32)
    p["dec_ln2_g"], p["dec_ln2_b"] = jnp.ones((h,), _F32), jnp.zeros((h,), _F32)
    p["dec_ln3_g"], p["dec_ln3_b"] = jnp.ones((h,), _F32), jnp.zeros((h,), _F32)

    p["out_w"], p["out_b"] = lin(h, vocab_tgt)
    return p


# ----------------------------------- main ------------------------------------ #
if __name__ == "__main__":
    # NOTE: toy shapes (H=32, V=40 < 128 lanes) exercise masked partial stores;
    # production dims should be multiples of 128 for lane-dense outputs.
    B, S, H, HEADS, FFN = 2, 8, 32, 4, 64
    VOCAB_SRC, VOCAB_TGT = 40, 40

    key = jax.random.PRNGKey(0)
    k_param, k_enc, k_dec = jax.random.split(key, 3)

    params = init_params(k_param, VOCAB_SRC, VOCAB_TGT, H, FFN, HEADS)
    enc_X = jax.random.randint(k_enc, (B, S), 0, VOCAB_SRC, dtype=jnp.int32)
    dec_X = jax.random.randint(k_dec, (B, S), 0, VOCAB_TGT, dtype=jnp.int32)
    src_valid_len = jnp.array([S, 5], dtype=jnp.int32)

    logits = encoder_decoder_forward(enc_X, dec_X, src_valid_len, params)
    jax.block_until_ready(logits)

    assert logits.shape == (B, S, VOCAB_TGT)
    assert bool(jnp.all(jnp.isfinite(logits)))
    print("KERNEL_OK")
</pallas_src>

<mosaic_0001>
module attributes {stable_mosaic.version = 11 : i64} {
  func.func @_mha_addnorm_kernel(%arg0: i32, %arg1: i32, %arg2: memref<2xi32, #tpu.memory_space<smem>>, %arg3: memref<1x8x32xf32, #tpu.memory_space<vmem>>, %arg4: memref<1x8x32xf32, #tpu.memory_space<vmem>>, %arg5: memref<32x32xbf16, #tpu.memory_space<vmem>>, %arg6: memref<1x32xf32, #tpu.memory_space<vmem>>, %arg7: memref<32x64xbf16, #tpu.memory_space<vmem>>, %arg8: memref<1x64xf32, #tpu.memory_space<vmem>>, %arg9: memref<32x32xbf16, #tpu.memory_space<vmem>>, %arg10: memref<1x32xf32, #tpu.memory_space<vmem>>, %arg11: memref<1x32xf32, #tpu.memory_space<vmem>>, %arg12: memref<1x32xf32, #tpu.memory_space<vmem>>, %arg13: memref<1x8x32xf32, #tpu.memory_space<vmem>>) attributes {dimension_semantics = [#tpu.dimension_semantics<parallel>, #tpu.dimension_semantics<parallel>], iteration_bounds = array<i64: 2, 1>, scalar_prefetch = 1 : i64, scratch_operands = 0 : i64, tpu.core_type = #tpu.core_type<tc>, window_params = [{transform_indices = @transform_0, window_bounds = array<i64: 1, 8, 32>}, {transform_indices = @transform_1, window_bounds = array<i64: 1, 8, 32>}, {pipeline_mode = #tpu.pipeline_mode<synchronous>, transform_indices = @transform_2, window_bounds = array<i64: 32, 32>}, {pipeline_mode = #tpu.pipeline_mode<synchronous>, transform_indices = @transform_3, window_bounds = array<i64: 1, 32>}, {pipeline_mode = #tpu.pipeline_mode<synchronous>, transform_indices = @transform_4, window_bounds = array<i64: 32, 64>}, {pipeline_mode = #tpu.pipeline_mode<synchronous>, transform_indices = @transform_5, window_bounds = array<i64: 1, 64>}, {pipeline_mode = #tpu.pipeline_mode<synchronous>, transform_indices = @transform_6, window_bounds = array<i64: 32, 32>}, {pipeline_mode = #tpu.pipeline_mode<synchronous>, transform_indices = @transform_7, window_bounds = array<i64: 1, 32>}, {pipeline_mode = #tpu.pipeline_mode<synchronous>, transform_indices = @transform_8, window_bounds = array<i64: 1, 32>}, {pipeline_mode = #tpu.pipeline_mode<synchronous>, transform_indices = @transform_9, window_bounds = array<i64: 1, 32>}, {transform_indices = @transform_10, window_bounds = array<i64: 1, 8, 32>}]} {
    %c0 = arith.constant 0 : index
    %c0_0 = arith.constant 0 : index
    %c0_1 = arith.constant 0 : index
    %0 = vector.load %arg3[%c0, %c0_0, %c0_1] : memref<1x8x32xf32, #tpu.memory_space<vmem>>, vector<1x8x32xf32>
    %1 = vector.shape_cast %0 : vector<1x8x32xf32> to vector<8x32xf32>
    %c0_2 = arith.constant 0 : index
    %c0_3 = arith.constant 0 : index
    %c0_4 = arith.constant 0 : index
    %2 = vector.load %arg4[%c0_2, %c0_3, %c0_4] : memref<1x8x32xf32, #tpu.memory_space<vmem>>, vector<1x8x32xf32>
    %3 = vector.shape_cast %2 : vector<1x8x32xf32> to vector<8x32xf32>
    %4 = arith.truncf %1 : vector<8x32xf32> to vector<8x32xbf16>
    %c0_5 = arith.constant 0 : index
    %c0_6 = arith.constant 0 : index
    %5 = vector.load %arg5[%c0_5, %c0_6] : memref<32x32xbf16, #tpu.memory_space<vmem>>, vector<32x32xbf16>
    %cst = arith.constant dense<0.000000e+00> : vector<8x32xf32>
    %6 = tpu.matmul %4, %5, %cst {dimension_numbers = #tpu.dot_dimension_numbers<[1], [0], [0], [1], [0, 0, 1, 1], [], []>} : vector<8x32xbf16>, vector<32x32xbf16>, vector<8x32xf32> -> vector<8x32xf32>
    %c0_7 = arith.constant 0 : index
    %c0_8 = arith.constant 0 : index
    %7 = vector.load %arg6[%c0_7, %c0_8] : memref<1x32xf32, #tpu.memory_space<vmem>>, vector<1x32xf32>
    %8 = vector.broadcast %7 : vector<1x32xf32> to vector<8x32xf32>
    %9 = arith.addf %6, %8 : vector<8x32xf32>
    %10 = arith.truncf %3 : vector<8x32xf32> to vector<8x32xbf16>
    %c0_9 = arith.constant 0 : index
    %c0_10 = arith.constant 0 : index
    %11 = vector.load %arg7[%c0_9, %c0_10] : memref<32x64xbf16, #tpu.memory_space<vmem>>, vector<32x64xbf16>
    %cst_11 = arith.constant dense<0.000000e+00> : vector<8x64xf32>
    %12 = tpu.matmul %10, %11, %cst_11 {dimension_numbers = #tpu.dot_dimension_numbers<[1], [0], [0], [1], [0, 0, 1, 1], [], []>} : vector<8x32xbf16>, vector<32x64xbf16>, vector<8x64xf32> -> vector<8x64xf32>
    %c0_12 = arith.constant 0 : index
    %c0_13 = arith.constant 0 : index
    %13 = vector.load %arg8[%c0_12, %c0_13] : memref<1x64xf32, #tpu.memory_space<vmem>>, vector<1x64xf32>
    %14 = vector.broadcast %13 : vector<1x64xf32> to vector<8x64xf32>
    %15 = arith.addf %12, %14 : vector<8x64xf32>
    %16 = vector.extract_strided_slice %15 {offsets = [0, 0], sizes = [8, 32], strides = [1, 1]} : vector<8x64xf32> to vector<8x32xf32>
    %17 = vector.extract_strided_slice %15 {offsets = [0, 32], sizes = [8, 32], strides = [1, 1]} : vector<8x64xf32> to vector<8x32xf32>
    %18 = tpu.iota {dimensions = array<i32: 1>} : vector<8x8xi32>
    %19 = arith.index_cast %arg0 : i32 to index
    %20 = memref.load %arg2[%19] : memref<2xi32, #tpu.memory_space<smem>>
    %21 = vector.broadcast %20 : i32 to vector<8x8xi32>
    %22 = arith.cmpi slt, %18, %21 : vector<8x8xi32>
    %23 = tpu.iota {dimensions = array<i32: 1>} : vector<8x32xi32>
    %cst_14 = arith.constant 0.000000e+00 : f32
    %24 = vector.broadcast %cst_14 : f32 to vector<8x32xf32>
    %25 = vector.extract_strided_slice %9 {offsets = [0, 0], sizes = [8, 8], strides = [1, 1]} : vector<8x32xf32> to vector<8x8xf32>
    %26 = vector.extract_strided_slice %16 {offsets = [0, 0], sizes = [8, 8], strides = [1, 1]} : vector<8x32xf32> to vector<8x8xf32>
    %27 = arith.truncf %25 : vector<8x8xf32> to vector<8x8xbf16>
    %28 = arith.truncf %26 : vector<8x8xf32> to vector<8x8xbf16>
    "tpu.trace_start"() <{level = 10 : i32, message = "qd,kd->qk"}> : () -> ()
    %cst_15 = arith.constant dense<0.000000e+00> : vector<8x8xf32>
    %29 = tpu.matmul %27, %28, %cst_15 {dimension_numbers = #tpu.dot_dimension_numbers<[1], [1], [0], [0], [0, 0, 1, 0], [], []>} : vector<8x8xbf16>, vector<8x8xbf16>, vector<8x8xf32> -> vector<8x8xf32>
    "tpu.trace_stop"() : () -> ()
    %cst_16 = arith.constant 0.353553385 : f32
    %30 = vector.broadcast %cst_16 : f32 to vector<8x8xf32>
    %31 = arith.mulf %29, %30 : vector<8x8xf32>
    %cst_17 = arith.constant -1.000000e+09 : f32
    %32 = vector.broadcast %cst_17 : f32 to vector<8x8xf32>
    %33 = arith.select %22, %31, %32 : vector<8x8xi1>, vector<8x8xf32>
    %cst_18 = arith.constant dense<0xFF800000> : vector<8xf32>
    %34 = vector.multi_reduction <maximumf>, %33, %cst_18 [1] : vector<8x8xf32> to vector<8xf32>
    %35 = vector.shape_cast %34 : vector<8xf32> to vector<8x1xf32>
    %36 = vector.broadcast %35 : vector<8x1xf32> to vector<8x8xf32>
    %37 = arith.subf %33, %36 : vector<8x8xf32>
    %38 = math.exp %37 : vector<8x8xf32>
    %cst_19 = arith.constant dense<0.000000e+00> : vector<8xf32>
    %39 = vector.multi_reduction <add>, %38, %cst_19 [1] : vector<8x8xf32> to vector<8xf32>
    %40 = vector.shape_cast %39 : vector<8xf32> to vector<8x1xf32>
    %41 = tpu.reciprocal %40 {approx = true} : vector<8x1xf32> -> vector<8x1xf32>
    %42 = vector.broadcast %41 : vector<8x1xf32> to vector<8x8xf32>
    %43 = arith.mulf %38, %42 : vector<8x8xf32>
    %c0_i32 = arith.constant 0 : i32
    %44 = vector.broadcast %c0_i32 : i32 to vector<8x32xi32>
    %45 = arith.cmpi sge, %23, %44 : vector<8x32xi32>
    %c8_i32 = arith.constant 8 : i32
    %46 = vector.broadcast %c8_i32 : i32 to vector<8x32xi32>
    %47 = arith.cmpi slt, %23, %46 : vector<8x32xi32>
    %48 = arith.andi %45, %47 : vector<8x32xi1>
    %cst_20 = arith.constant 0.000000e+00 : f32
    %49 = vector.broadcast %cst_20 : f32 to vector<8x32xf32>
    %50 = arith.select %48, %17, %49 : vector<8x32xi1>, vector<8x32xf32>
    %51 = arith.truncf %43 : vector<8x8xf32> to vector<8x8xbf16>
    %52 = arith.truncf %50 : vector<8x32xf32> to vector<8x32xbf16>
    %cst_21 = arith.constant dense<0.000000e+00> : vector<8x32xf32>
    %53 = tpu.matmul %51, %52, %cst_21 {dimension_numbers = #tpu.dot_dimension_numbers<[1], [0], [0], [1], [0, 0, 1, 1], [], []>} : vector<8x8xbf16>, vector<8x32xbf16>, vector<8x32xf32> -> vector<8x32xf32>
    %54 = arith.addf %24, %53 : vector<8x32xf32>
    %55 = vector.extract_strided_slice %9 {offsets = [0, 8], sizes = [8, 8], strides = [1, 1]} : vector<8x32xf32> to vector<8x8xf32>
    %56 = vector.extract_strided_slice %16 {offsets = [0, 8], sizes = [8, 8], strides = [1, 1]} : vector<8x32xf32> to vector<8x8xf32>
    %57 = arith.truncf %55 : vector<8x8xf32> to vector<8x8xbf16>
    %58 = arith.truncf %56 : vector<8x8xf32> to vector<8x8xbf16>
    "tpu.trace_start"() <{level = 10 : i32, message = "qd,kd->qk"}> : () -> ()
    %cst_22 = arith.constant dense<0.000000e+00> : vector<8x8xf32>
    %59 = tpu.matmul %57, %58, %cst_22 {dimension_numbers = #tpu.dot_dimension_numbers<[1], [1], [0], [0], [0, 0, 1, 0], [], []>} : vector<8x8xbf16>, vector<8x8xbf16>, vector<8x8xf32> -> vector<8x8xf32>
    "tpu.trace_stop"() : () -> ()
    %cst_23 = arith.constant 0.353553385 : f32
    %60 = vector.broadcast %cst_23 : f32 to vector<8x8xf32>
    %61 = arith.mulf %59, %60 : vector<8x8xf32>
    %cst_24 = arith.constant -1.000000e+09 : f32
    %62 = vector.broadcast %cst_24 : f32 to vector<8x8xf32>
    %63 = arith.select %22, %61, %62 : vector<8x8xi1>, vector<8x8xf32>
    %cst_25 = arith.constant dense<0xFF800000> : vector<8xf32>
    %64 = vector.multi_reduction <maximumf>, %63, %cst_25 [1] : vector<8x8xf32> to vector<8xf32>
    %65 = vector.shape_cast %64 : vector<8xf32> to vector<8x1xf32>
    %66 = vector.broadcast %65 : vector<8x1xf32> to vector<8x8xf32>
    %67 = arith.subf %63, %66 : vector<8x8xf32>
    %68 = math.exp %67 : vector<8x8xf32>
    %cst_26 = arith.constant dense<0.000000e+00> : vector<8xf32>
    %69 = vector.multi_reduction <add>, %68, %cst_26 [1] : vector<8x8xf32> to vector<8xf32>
    %70 = vector.shape_cast %69 : vector<8xf32> to vector<8x1xf32>
    %71 = tpu.reciprocal %70 {approx = true} : vector<8x1xf32> -> vector<8x1xf32>
    %72 = vector.broadcast %71 : vector<8x1xf32> to vector<8x8xf32>
    %73 = arith.mulf %68, %72 : vector<8x8xf32>
    %c8_i32_27 = arith.constant 8 : i32
    %74 = vector.broadcast %c8_i32_27 : i32 to vector<8x32xi32>
    %75 = arith.cmpi sge, %23, %74 : vector<8x32xi32>
    %c16_i32 = arith.constant 16 : i32
    %76 = vector.broadcast %c16_i32 : i32 to vector<8x32xi32>
    %77 = arith.cmpi slt, %23, %76 : vector<8x32xi32>
    %78 = arith.andi %75, %77 : vector<8x32xi1>
    %cst_28 = arith.constant 0.000000e+00 : f32
    %79 = vector.broadcast %cst_28 : f32 to vector<8x32xf32>
    %80 = arith.select %78, %17, %79 : vector<8x32xi1>, vector<8x32xf32>
    %81 = arith.truncf %73 : vector<8x8xf32> to vector<8x8xbf16>
    %82 = arith.truncf %80 : vector<8x32xf32> to vector<8x32xbf16>
    %cst_29 = arith.constant dense<0.000000e+00> : vector<8x32xf32>
    %83 = tpu.matmul %81, %82, %cst_29 {dimension_numbers = #tpu.dot_dimension_numbers<[1], [0], [0], [1], [0, 0, 1, 1], [], []>} : vector<8x8xbf16>, vector<8x32xbf16>, vector<8x32xf32> -> vector<8x32xf32>
    %84 = arith.addf %54, %83 : vector<8x32xf32>
    %85 = vector.extract_strided_slice %9 {offsets = [0, 16], sizes = [8, 8], strides = [1, 1]} : vector<8x32xf32> to vector<8x8xf32>
    %86 = vector.extract_strided_slice %16 {offsets = [0, 16], sizes = [8, 8], strides = [1, 1]} : vector<8x32xf32> to vector<8x8xf32>
    %87 = arith.truncf %85 : vector<8x8xf32> to vector<8x8xbf16>
    %88 = arith.truncf %86 : vector<8x8xf32> to vector<8x8xbf16>
    "tpu.trace_start"() <{level = 10 : i32, message = "qd,kd->qk"}> : () -> ()
    %cst_30 = arith.constant dense<0.000000e+00> : vector<8x8xf32>
    %89 = tpu.matmul %87, %88, %cst_30 {dimension_numbers = #tpu.dot_dimension_numbers<[1], [1], [0], [0], [0, 0, 1, 0], [], []>} : vector<8x8xbf16>, vector<8x8xbf16>, vector<8x8xf32> -> vector<8x8xf32>
    "tpu.trace_stop"() : () -> ()
    %cst_31 = arith.constant 0.353553385 : f32
    %90 = vector.broadcast %cst_31 : f32 to vector<8x8xf32>
    %91 = arith.mulf %89, %90 : vector<8x8xf32>
    %cst_32 = arith.constant -1.000000e+09 : f32
    %92 = vector.broadcast %cst_32 : f32 to vector<8x8xf32>
    %93 = arith.select %22, %91, %92 : vector<8x8xi1>, vector<8x8xf32>
    %cst_33 = arith.constant dense<0xFF800000> : vector<8xf32>
    %94 = vector.multi_reduction <maximumf>, %93, %cst_33 [1] : vector<8x8xf32> to vector<8xf32>
    %95 = vector.shape_cast %94 : vector<8xf32> to vector<8x1xf32>
    %96 = vector.broadcast %95 : vector<8x1xf32> to vector<8x8xf32>
    %97 = arith.subf %93, %96 : vector<8x8xf32>
    %98 = math.exp %97 : vector<8x8xf32>
    %cst_34 = arith.constant dense<0.000000e+00> : vector<8xf32>
    %99 = vector.multi_reduction <add>, %98, %cst_34 [1] : vector<8x8xf32> to vector<8xf32>
    %100 = vector.shape_cast %99 : vector<8xf32> to vector<8x1xf32>
    %101 = tpu.reciprocal %100 {approx = true} : vector<8x1xf32> -> vector<8x1xf32>
    %102 = vector.broadcast %101 : vector<8x1xf32> to vector<8x8xf32>
    %103 = arith.mulf %98, %102 : vector<8x8xf32>
    %c16_i32_35 = arith.constant 16 : i32
    %104 = vector.broadcast %c16_i32_35 : i32 to vector<8x32xi32>
    %105 = arith.cmpi sge, %23, %104 : vector<8x32xi32>
    %c24_i32 = arith.constant 24 : i32
    %106 = vector.broadcast %c24_i32 : i32 to vector<8x32xi32>
    %107 = arith.cmpi slt, %23, %106 : vector<8x32xi32>
    %108 = arith.andi %105, %107 : vector<8x32xi1>
    %cst_36 = arith.constant 0.000000e+00 : f32
    %109 = vector.broadcast %cst_36 : f32 to vector<8x32xf32>
    %110 = arith.select %108, %17, %109 : vector<8x32xi1>, vector<8x32xf32>
    %111 = arith.truncf %103 : vector<8x8xf32> to vector<8x8xbf16>
    %112 = arith.truncf %110 : vector<8x32xf32> to vector<8x32xbf16>
    %cst_37 = arith.constant dense<0.000000e+00> : vector<8x32xf32>
    %113 = tpu.matmul %111, %112, %cst_37 {dimension_numbers = #tpu.dot_dimension_numbers<[1], [0], [0], [1], [0, 0, 1, 1], [], []>} : vector<8x8xbf16>, vector<8x32xbf16>, vector<8x32xf32> -> vector<8x32xf32>
    %114 = arith.addf %84, %113 : vector<8x32xf32>
    %115 = vector.extract_strided_slice %9 {offsets = [0, 24], sizes = [8, 8], strides = [1, 1]} : vector<8x32xf32> to vector<8x8xf32>
    %116 = vector.extract_strided_slice %16 {offsets = [0, 24], sizes = [8, 8], strides = [1, 1]} : vector<8x32xf32> to vector<8x8xf32>
    %117 = arith.truncf %115 : vector<8x8xf32> to vector<8x8xbf16>
    %118 = arith.truncf %116 : vector<8x8xf32> to vector<8x8xbf16>
    "tpu.trace_start"() <{level = 10 : i32, message = "qd,kd->qk"}> : () -> ()
    %cst_38 = arith.constant dense<0.000000e+00> : vector<8x8xf32>
    %119 = tpu.matmul %117, %118, %cst_38 {dimension_numbers = #tpu.dot_dimension_numbers<[1], [1], [0], [0], [0, 0, 1, 0], [], []>} : vector<8x8xbf16>, vector<8x8xbf16>, vector<8x8xf32> -> vector<8x8xf32>
    "tpu.trace_stop"() : () -> ()
    %cst_39 = arith.constant 0.353553385 : f32
    %120 = vector.broadcast %cst_39 : f32 to vector<8x8xf32>
    %121 = arith.mulf %119, %120 : vector<8x8xf32>
    %cst_40 = arith.constant -1.000000e+09 : f32
    %122 = vector.broadcast %cst_40 : f32 to vector<8x8xf32>
    %123 = arith.select %22, %121, %122 : vector<8x8xi1>, vector<8x8xf32>
    %cst_41 = arith.constant dense<0xFF800000> : vector<8xf32>
    %124 = vector.multi_reduction <maximumf>, %123, %cst_41 [1] : vector<8x8xf32> to vector<8xf32>
    %125 = vector.shape_cast %124 : vector<8xf32> to vector<8x1xf32>
    %126 = vector.broadcast %125 : vector<8x1xf32> to vector<8x8xf32>
    %127 = arith.subf %123, %126 : vector<8x8xf32>
    %128 = math.exp %127 : vector<8x8xf32>
    %cst_42 = arith.constant dense<0.000000e+00> : vector<8xf32>
    %129 = vector.multi_reduction <add>, %128, %cst_42 [1] : vector<8x8xf32> to vector<8xf32>
    %130 = vector.shape_cast %129 : vector<8xf32> to vector<8x1xf32>
    %131 = tpu.reciprocal %130 {approx = true} : vector<8x1xf32> -> vector<8x1xf32>
    %132 = vector.broadcast %131 : vector<8x1xf32> to vector<8x8xf32>
    %133 = arith.mulf %128, %132 : vector<8x8xf32>
    %c24_i32_43 = arith.constant 24 : i32
    %134 = vector.broadcast %c24_i32_43 : i32 to vector<8x32xi32>
    %135 = arith.cmpi sge, %23, %134 : vector<8x32xi32>
    %c32_i32 = arith.constant 32 : i32
    %136 = vector.broadcast %c32_i32 : i32 to vector<8x32xi32>
    %137 = arith.cmpi slt, %23, %136 : vector<8x32xi32>
    %138 = arith.andi %135, %137 : vector<8x32xi1>
    %cst_44 = arith.constant 0.000000e+00 : f32
    %139 = vector.broadcast %cst_44 : f32 to vector<8x32xf32>
    %140 = arith.select %138, %17, %139 : vector<8x32xi1>, vector<8x32xf32>
    %141 = arith.truncf %133 : vector<8x8xf32> to vector<8x8xbf16>
    %142 = arith.truncf %140 : vector<8x32xf32> to vector<8x32xbf16>
    %cst_45 = arith.constant dense<0.000000e+00> : vector<8x32xf32>
    %143 = tpu.matmul %141, %142, %cst_45 {dimension_numbers = #tpu.dot_dimension_numbers<[1], [0], [0], [1], [0, 0, 1, 1], [], []>} : vector<8x8xbf16>, vector<8x32xbf16>, vector<8x32xf32> -> vector<8x32xf32>
    %144 = arith.addf %114, %143 : vector<8x32xf32>
    %145 = arith.truncf %144 : vector<8x32xf32> to vector<8x32xbf16>
    %c0_46 = arith.constant 0 : index
    %c0_47 = arith.constant 0 : index
    %146 = vector.load %arg9[%c0_46, %c0_47] : memref<32x32xbf16, #tpu.memory_space<vmem>>, vector<32x32xbf16>
    %cst_48 = arith.constant dense<0.000000e+00> : vector<8x32xf32>
    %147 = tpu.matmul %145, %146, %cst_48 {dimension_numbers = #tpu.dot_dimension_numbers<[1], [0], [0], [1], [0, 0, 1, 1], [], []>} : vector<8x32xbf16>, vector<32x32xbf16>, vector<8x32xf32> -> vector<8x32xf32>
    %c0_49 = arith.constant 0 : index
    %c0_50 = arith.constant 0 : index
    %148 = vector.load %arg10[%c0_49, %c0_50] : memref<1x32xf32, #tpu.memory_space<vmem>>, vector<1x32xf32>
    %149 = vector.broadcast %148 : vector<1x32xf32> to vector<8x32xf32>
    %150 = arith.addf %147, %149 : vector<8x32xf32>
    %151 = arith.addf %1, %150 : vector<8x32xf32>
    %cst_51 = arith.constant dense<0.000000e+00> : vector<8xf32>
    %152 = vector.multi_reduction <add>, %151, %cst_51 [1] : vector<8x32xf32> to vector<8xf32>
    %153 = vector.shape_cast %152 : vector<8xf32> to vector<8x1xf32>
    %cst_52 = arith.constant 3.200000e+01 : f32
    %154 = vector.broadcast %cst_52 : f32 to vector<8x1xf32>
    %155 = arith.divf %153, %154 : vector<8x1xf32>
    %156 = vector.broadcast %155 : vector<8x1xf32> to vector<8x32xf32>
    %157 = arith.subf %151, %156 : vector<8x32xf32>
    %158 = arith.mulf %157, %157 : vector<8x32xf32>
    %cst_53 = arith.constant dense<0.000000e+00> : vector<8xf32>
    %159 = vector.multi_reduction <add>, %158, %cst_53 [1] : vector<8x32xf32> to vector<8xf32>
    %160 = vector.shape_cast %159 : vector<8xf32> to vector<8x1xf32>
    %cst_54 = arith.constant 3.200000e+01 : f32
    %161 = vector.broadcast %cst_54 : f32 to vector<8x1xf32>
    %162 = arith.divf %160, %161 : vector<8x1xf32>
    %163 = vector.broadcast %155 : vector<8x1xf32> to vector<8x32xf32>
    %164 = arith.subf %151, %163 : vector<8x32xf32>
    %cst_55 = arith.constant 9.99999974E-6 : f32
    %165 = vector.broadcast %cst_55 : f32 to vector<8x1xf32>
    %166 = arith.addf %162, %165 : vector<8x1xf32>
    %167 = math.rsqrt %166 : vector<8x1xf32>
    %168 = vector.broadcast %167 : vector<8x1xf32> to vector<8x32xf32>
    %169 = arith.mulf %164, %168 : vector<8x32xf32>
    %c0_56 = arith.constant 0 : index
    %c0_57 = arith.constant 0 : index
    %170 = vector.load %arg11[%c0_56, %c0_57] : memref<1x32xf32, #tpu.memory_space<vmem>>, vector<1x32xf32>
    %171 = vector.broadcast %170 : vector<1x32xf32> to vector<8x32xf32>
    %172 = arith.mulf %169, %171 : vector<8x32xf32>
    %c0_58 = arith.constant 0 : index
    %c0_59 = arith.constant 0 : index
    %173 = vector.load %arg12[%c0_58, %c0_59] : memref<1x32xf32, #tpu.memory_space<vmem>>, vector<1x32xf32>
    %174 = vector.broadcast %173 : vector<1x32xf32> to vector<8x32xf32>
    %175 = arith.addf %172, %174 : vector<8x32xf32>
    %c0_60 = arith.constant 0 : index
    %c0_61 = arith.constant 0 : index
    %c0_62 = arith.constant 0 : index
    %176 = vector.load %arg13[%c0_60, %c0_61, %c0_62] : memref<1x8x32xf32, #tpu.memory_space<vmem>>, vector<1x8x32xf32>
    %177 = vector.shape_cast %176 : vector<1x8x32xf32> to vector<8x32xf32>
    %178 = vector.shape_cast %175 : vector<8x32xf32> to vector<1x8x32xf32>
    tpu.vector_store %arg13[%c0_60, %c0_61, %c0_62], %178 {strides = array<i32>} : memref<1x8x32xf32, #tpu.memory_space<vmem>>, vector<1x8x32xf32>,
    return
  }
  func.func @transform_0(%arg0: i32, %arg1: i32, %arg2: memref<2xi32, #tpu.memory_space<smem>>) -> (i32, i32, i32) {
    %c0_i32 = arith.constant 0 : i32
    %c0_i32_0 = arith.constant 0 : i32
    return %arg0, %arg1, %c0_i32 : i32, i32, i32
  }
  func.func @transform_1(%arg0: i32, %arg1: i32, %arg2: memref<2xi32, #tpu.memory_space<smem>>) -> (i32, i32, i32) {
    %c0_i32 = arith.constant 0 : i32
    %c0_i32_0 = arith.constant 0 : i32
    %c0_i32_1 = arith.constant 0 : i32
    return %arg0, %c0_i32, %c0_i32_0 : i32, i32, i32
  }
  func.func @transform_2(%arg0: i32, %arg1: i32, %arg2: memref<2xi32, #tpu.memory_space<smem>>) -> (i32, i32) {
    %c0_i32 = arith.constant 0 : i32
    %c0_i32_0 = arith.constant 0 : i32
    %c0_i32_1 = arith.constant 0 : i32
    return %c0_i32, %c0_i32_0 : i32, i32
  }
  func.func @transform_3(%arg0: i32, %arg1: i32, %arg2: memref<2xi32, #tpu.memory_space<smem>>) -> (i32, i32) {
    %c0_i32 = arith.constant 0 : i32
    %c0_i32_0 = arith.constant 0 : i32
    %c0_i32_1 = arith.constant 0 : i32
    return %c0_i32, %c0_i32_0 : i32, i32
  }
  func.func @transform_4(%arg0: i32, %arg1: i32, %arg2: memref<2xi32, #tpu.memory_space<smem>>) -> (i32, i32) {
    %c0_i32 = arith.constant 0 : i32
    %c0_i32_0 = arith.constant 0 : i32
    %c0_i32_1 = arith.constant 0 : i32
    return %c0_i32, %c0_i32_0 : i32, i32
  }
  func.func @transform_5(%arg0: i32, %arg1: i32, %arg2: memref<2xi32, #tpu.memory_space<smem>>) -> (i32, i32) {
    %c0_i32 = arith.constant 0 : i32
    %c0_i32_0 = arith.constant 0 : i32
    %c0_i32_1 = arith.constant 0 : i32
    return %c0_i32, %c0_i32_0 : i32, i32
  }
  func.func @transform_6(%arg0: i32, %arg1: i32, %arg2: memref<2xi32, #tpu.memory_space<smem>>) -> (i32, i32) {
    %c0_i32 = arith.constant 0 : i32
    %c0_i32_0 = arith.constant 0 : i32
    %c0_i32_1 = arith.constant 0 : i32
    return %c0_i32, %c0_i32_0 : i32, i32
  }
  func.func @transform_7(%arg0: i32, %arg1: i32, %arg2: memref<2xi32, #tpu.memory_space<smem>>) -> (i32, i32) {
    %c0_i32 = arith.constant 0 : i32
    %c0_i32_0 = arith.constant 0 : i32
    %c0_i32_1 = arith.constant 0 : i32
    return %c0_i32, %c0_i32_0 : i32, i32
  }
  func.func @transform_8(%arg0: i32, %arg1: i32, %arg2: memref<2xi32, #tpu.memory_space<smem>>) -> (i32, i32) {
    %c0_i32 = arith.constant 0 : i32
    %c0_i32_0 = arith.constant 0 : i32
    %c0_i32_1 = arith.constant 0 : i32
    return %c0_i32, %c0_i32_0 : i32, i32
  }
  func.func @transform_9(%arg0: i32, %arg1: i32, %arg2: memref<2xi32, #tpu.memory_space<smem>>) -> (i32, i32) {
    %c0_i32 = arith.constant 0 : i32
    %c0_i32_0 = arith.constant 0 : i32
    %c0_i32_1 = arith.constant 0 : i32
    return %c0_i32, %c0_i32_0 : i32, i32
  }
  func.func @transform_10(%arg0: i32, %arg1: i32, %arg2: memref<2xi32, #tpu.memory_space<smem>>) -> (i32, i32, i32) {
    %c0_i32 = arith.constant 0 : i32
    %c0_i32_0 = arith.constant 0 : i32
    return %arg0, %arg1, %c0_i32 : i32, i32, i32
  }
}

</mosaic_0001>

<llo_original>
// kernel: tpu_custom_call.1
$region0: #{tpu_custom_call.1}
  #allocation0 [shape = 'u32[]', space=smem, size = 0x4, offset = 0x4, fixed_abs, tag = 'smem constant byte address 0x4 - core index']
  #allocation1 [shape = 'u32[144,128]{1,0:T(1,128)}', space=vmem, size = 0x12000, scoped, tag = 'internal scratch']
  #allocation2 [shape = 's32[1]{0}', space=sflag, size = 0x4, scoped, tag = 'scoped memory for tpu_custom_call.1']
  #allocation3 [shape = 'u8[512]{0}', space=smem, size = 0x200, scoped, tag = 'prefetched SMEM operand 0']
  %s0 = inlined_call_operand.hbm [shape: s32[2], index: 0, kind: input, shape index: {}]
  %s1 = inlined_call_operand.hbm [shape: f32[2,8,32], index: 1, kind: input, shape index: {}]
  %s2 = inlined_call_operand.hbm [shape: f32[2,8,32], index: 2, kind: input, shape index: {}]
  %s3 = inlined_call_operand.hbm [shape: bf16[32,32], index: 3, kind: input, shape index: {}]
  %s4 = inlined_call_operand.vmem [shape: f32[1,32], index: 4, kind: input, shape index: {}]
  %s5 = inlined_call_operand.hbm [shape: bf16[32,64], index: 5, kind: input, shape index: {}]
  %s6 = inlined_call_operand.vmem [shape: f32[1,64], index: 6, kind: input, shape index: {}]
  %s7 = inlined_call_operand.hbm [shape: bf16[32,32], index: 7, kind: input, shape index: {}]
  %s8 = inlined_call_operand.vmem [shape: f32[1,32], index: 8, kind: input, shape index: {}]
  %s9 = inlined_call_operand.vmem [shape: f32[1,32], index: 9, kind: input, shape index: {}]
  %s10 = inlined_call_operand.vmem [shape: f32[1,32], index: 10, kind: input, shape index: {}]
  %s11 = inlined_call_operand.hbm [shape: f32[2,8,32], index: 11, kind: output, shape index: {}]
  %s12 = sld [smem:[#allocation0]]
  $region93: #{tpu_custom_call.1} parent=0
    _
  %s14 = ssub.s32 1, %s12
  %s15 = scalar_select 0, %s14, %s12
  %17 = dma.hbm_to_smem %s0, 16, [#allocation3], [#allocation2]
  %18 = dma.done [#allocation2], 16
  %19 = sfence
  $region1: #{tpu_custom_call.1} parent=0
    #allocation4 [shape = 'u8[8192]{0}', space=vmem, size = 0x2000, scoped, tag = 'input window, operand 1']
    #allocation5 [shape = 's32[2]{0}', space=sflag, size = 0x8, scoped, tag = 'scoped memory for tpu_custom_call.1']
    #allocation6 [shape = 's32[2]{0}', space=sflag, size = 0x8, scoped, tag = 'scoped memory for tpu_custom_call.1']
    #allocation7 [shape = 'u8[8192]{0}', space=vmem, size = 0x2000, scoped, tag = 'input window, operand 2']
    #allocation8 [shape = 's32[2]{0}', space=sflag, size = 0x8, scoped, tag = 'scoped memory for tpu_custom_call.1']
    #allocation9 [shape = 'u8[8192]{0}', space=vmem, size = 0x2000, scoped, tag = 'input window, operand 3, single buffered']
    #allocation10 [shape = 'u8[8192]{0}', space=vmem, size = 0x2000, scoped, tag = 'input window, operand 5, single buffered']
    #allocation11 [shape = 's32[1]{0}', space=sflag, size = 0x4, scoped, tag = 'scoped memory for tpu_custom_call.1']
    #allocation12 [shape = 'u8[8192]{0}', space=vmem, size = 0x2000, scoped, tag = 'input window, operand 7, single buffered']
    #allocation13 [shape = 'u8[8192]{0}', space=vmem, size = 0x2000, scoped, tag = 'output window, operand 0']
    %20 = vsyncpa [#allocation5], 0
    %s21 = scalar_lea.sflag [#allocation5], 1
    %22 = vsyncpa %s21, 0
    %23 = vsyncpa [#allocation8], 0
    %s24 = scalar_lea.sflag [#allocation8], 1
    %25 = vsyncpa %s24, 0
    %26 = vsyncpa [#allocation11], 0
    %27 = vsyncpa [#allocation6], 0
    %s28 = scalar_lea.sflag [#allocation6], 1
    %29 = vsyncpa %s28, 0
    loop: start=0, step=1, limit=4
    $region2: #{tpu_custom_call.1} parent=1 // loop_pre_header
      _
    $region3: #{tpu_custom_call.1} parent=1 // loop_header
      %s31 = sphi 0, %s35
      %p32 = scmp.ge.s32.totalorder %s31, 4
      %s38 = sphi 0, %s50
      %s39 = sphi 0, %s46
      %s40 = sphi 0, %s38
      %s41 = sphi 0, %s39
      %s42 = sphi 0, %s40
      %s43 = sphi 0, %s41
      %s55 = sphi 0, %s57
      %s58 = sphi 0, %s55
      %s59 = sphi 0, %s58
      %s75 = sphi 0, %s59
      %s81 = sphi 0, %s83
      %s84 = sphi 0, %s81
      %s85 = sphi 0, %s84
      %s101 = sphi 0, %s85
      %s105 = sphi 0, %s105
      %s107 = sphi 0, %s105
      %s108 = sphi 0, %s107
      %s122 = sphi 0, %s108
      %s126 = sphi 0, %s126
      %s128 = sphi 0, %s126
      %s129 = sphi 0, %s128
      %s143 = sphi 0, %s129
      %s147 = sphi 0, %s147
      %s149 = sphi 0, %s147
      %s150 = sphi 0, %s149
      %s164 = sphi 0, %s150
      %s168 = sphi 0, %s168
      %s170 = sphi 0, %s168
      %s171 = sphi 0, %s170
      %s185 = sphi 0, %s171
      %s189 = sphi 0, %s189
      %s191 = sphi 0, %s189
      %s192 = sphi 0, %s191
      %s206 = sphi 0, %s192
      %s210 = sphi 0, %s210
      %s212 = sphi 0, %s210
      %s213 = sphi 0, %s212
      %s227 = sphi 0, %s213
      %s231 = sphi 0, %s231
      %s233 = sphi 0, %s231
      %s234 = sphi 0, %s233
      %s248 = sphi 0, %s234
      %s252 = sphi 0, %s252
      %s254 = sphi 0, %s252
      %s255 = sphi 0, %s254
      %s269 = sphi 0, %s255
      %s277 = sphi 0, %s279
      %s280 = sphi 0, %s277
      %s281 = sphi 0, %s280
      %s297 = sphi 0, %s281
    $region4: #{tpu_custom_call.1} parent=1 // loop_header_branch
      %34 = sbr.rel (%p32) target = $region8
    $region5: #{tpu_custom_call.1} parent=1 // loop_body
      %s36 = ssub.s32 %s31, 1
      %s37 = ssub.s32 %s31, 2
      %s44 = sadd.s32 1, %s39
      %p45 = scmp.ge.s32.totalorder %s44, 1
      %s46 = scalar_select %p45, 0, %s44
      %s47 = sadd.s32 1, %s38
      %s48 = scalar_select %p45, %s47, %s38
      %p49 = scmp.ge.s32.totalorder %s48, 2
      %s50 = scalar_select %p49, 0, %s48
      %s51 = ssub.s32 %s38, %s50
      %s52 = ssub.s32 %s39, %s46
      %s53 = sor.u32 %s51, %s52
      %p54 = scmp.eq.s32.totalorder %s53, 0
      %s56 = sadd.s32 %s55, 1
      %s57 = scalar_select %p54, %s55, %s56
      %p60 = pneg %p54
      %p61 = scmp.eq.s32.totalorder %s31, 1
      %p62 = por %p60, %p61
      %p63 = scmp.ne.s32.totalorder %s55, %s58
      %p64 = scmp.eq.s32.totalorder %s31, 0
      %p65 = por %p63, %p64
      %p66 = scmp.ne.s32.totalorder %s55, %s58
      %p67 = scmp.eq.s32.totalorder %s36, 1
      %p68 = por %p66, %p67
      %p69 = scmp.ne.s32.totalorder %s58, %s59
      %p70 = scmp.eq.s32.totalorder %s36, 0
      %p71 = por %p69, %p70
      %p72 = scmp.ne.s32.totalorder %s58, %s59
      %p73 = scmp.eq.s32.totalorder %s37, 1
      %p74 = por %p72, %p73
      %p76 = scmp.ne.s32.totalorder %s59, %s75
      %p77 = scmp.eq.s32.totalorder %s37, 0
      %p78 = por %p76, %p77
      %s79 = ssub.s32 %s38, %s50
      %p80 = scmp.eq.s32.totalorder %s79, 0
      %s82 = sadd.s32 %s81, 1
      %s83 = scalar_select %p80, %s81, %s82
      %p86 = pneg %p80
      %p87 = scmp.eq.s32.totalorder %s31, 1
      %p88 = por %p86, %p87
      %p89 = scmp.ne.s32.totalorder %s81, %s84
      %p90 = scmp.eq.s32.totalorder %s31, 0
      %p91 = por %p89, %p90
      %p92 = scmp.ne.s32.totalorder %s81, %s84
      %p93 = scmp.eq.s32.totalorder %s36, 1
      %p94 = por %p92, %p93
      %p95 = scmp.ne.s32.totalorder %s84, %s85
      %p96 = scmp.eq.s32.totalorder %s36, 0
      %p97 = por %p95, %p96
      %p98 = scmp.ne.s32.totalorder %s84, %s85
      %p99 = scmp.eq.s32.totalorder %s37, 1
      %p100 = por %p98, %p99
      %p102 = scmp.ne.s32.totalorder %s85, %s101
      %p103 = scmp.eq.s32.totalorder %s37, 0
      %p104 = por %p102, %p103
      %s106 = sadd.s32 %s105, 1
      %p109 = scmp.eq.s32.totalorder %s31, 1
      %p110 = scmp.ne.s32.totalorder %s105, %s107
      %p111 = scmp.eq.s32.totalorder %s31, 0
      %p112 = por %p110, %p111
      %p113 = scmp.ne.s32.totalorder %s105, %s107
      %p114 = scmp.eq.s32.totalorder %s36, 1
      %p115 = por %p113, %p114
      %p116 = scmp.ne.s32.totalorder %s107, %s108
      %p117 = scmp.eq.s32.totalorder %s36, 0
      %p118 = por %p116, %p117
      %p119 = scmp.ne.s32.totalorder %s107, %s108
      %p120 = scmp.eq.s32.totalorder %s37, 1
      %p121 = por %p119, %p120
      %p123 = scmp.ne.s32.totalorder %s108, %s122
      %p124 = scmp.eq.s32.totalorder %s37, 0
      %p125 = por %p123, %p124
      %s127 = sadd.s32 %s126, 1
      %p130 = scmp.eq.s32.totalorder %s31, 1
      %p131 = scmp.ne.s32.totalorder %s126, %s128
      %p132 = scmp.eq.s32.totalorder %s31, 0
      %p133 = por %p131, %p132
      %p134 = scmp.ne.s32.totalorder %s126, %s128
      %p135 = scmp.eq.s32.totalorder %s36, 1
      %p136 = por %p134, %p135
      %p137 = scmp.ne.s32.totalorder %s128, %s129
      %p138 = scmp.eq.s32.totalorder %s36, 0
      %p139 = por %p137, %p138
      %p140 = scmp.ne.s32.totalorder %s128, %s129
      %p141 = scmp.eq.s32.totalorder %s37, 1
      %p142 = por %p140, %p141
      %p144 = scmp.ne.s32.totalorder %s129, %s143
      %p145 = scmp.eq.s32.totalorder %s37, 0
      %p146 = por %p144, %p145
      %s148 = sadd.s32 %s147, 1
      %p151 = scmp.eq.s32.totalorder %s31, 1
      %p152 = scmp.ne.s32.totalorder %s147, %s149
      %p153 = scmp.eq.s32.totalorder %s31, 0
      %p154 = por %p152, %p153
      %p155 = scmp.ne.s32.totalorder %s147, %s149
      %p156 = scmp.eq.s32.totalorder %s36, 1
      %p157 = por %p155, %p156
      %p158 = scmp.ne.s32.totalorder %s149, %s150
      %p159 = scmp.eq.s32.totalorder %s36, 0
      %p160 = por %p158, %p159
      %p161 = scmp.ne.s32.totalorder %s149, %s150
      %p162 = scmp.eq.s32.totalorder %s37, 1
      %p163 = por %p161, %p162
      %p165 = scmp.ne.s32.totalorder %s150, %s164
      %p166 = scmp.eq.s32.totalorder %s37, 0
      %p167 = por %p165, %p166
      %s169 = sadd.s32 %s168, 1
      %p172 = scmp.eq.s32.totalorder %s31, 1
      %p173 = scmp.ne.s32.totalorder %s168, %s170
      %p174 = scmp.eq.s32.totalorder %s31, 0
      %p175 = por %p173, %p174
      %p176 = scmp.ne.s32.totalorder %s168, %s170
      %p177 = scmp.eq.s32.totalorder %s36, 1
      %p178 = por %p176, %p177
      %p179 = scmp.ne.s32.totalorder %s170, %s171
      %p180 = scmp.eq.s32.totalorder %s36, 0
      %p181 = por %p179, %p180
      %p182 = scmp.ne.s32.totalorder %s170, %s171
      %p183 = scmp.eq.s32.totalorder %s37, 1
      %p184 = por %p182, %p183
      %p186 = scmp.ne.s32.totalorder %s171, %s185
      %p187 = scmp.eq.s32.totalorder %s37, 0
      %p188 = por %p186, %p187
      %s190 = sadd.s32 %s189, 1
      %p193 = scmp.eq.s32.totalorder %s31, 1
      %p194 = scmp.ne.s32.totalorder %s189, %s191
      %p195 = scmp.eq.s32.totalorder %s31, 0
      %p196 = por %p194, %p195
      %p197 = scmp.ne.s32.totalorder %s189, %s191
      %p198 = scmp.eq.s32.totalorder %s36, 1
      %p199 = por %p197, %p198
      %p200 = scmp.ne.s32.totalorder %s191, %s192
      %p201 = scmp.eq.s32.totalorder %s36, 0
      %p202 = por %p200, %p201
      %p203 = scmp.ne.s32.totalorder %s191, %s192
      %p204 = scmp.eq.s32.totalorder %s37, 1
      %p205 = por %p203, %p204
      %p207 = scmp.ne.s32.totalorder %s192, %s206
      %p208 = scmp.eq.s32.totalorder %s37, 0
      %p209 = por %p207, %p208
      %s211 = sadd.s32 %s210, 1
      %p214 = scmp.eq.s32.totalorder %s31, 1
      %p215 = scmp.ne.s32.totalorder %s210, %s212
      %p216 = scmp.eq.s32.totalorder %s31, 0
      %p217 = por %p215, %p216
      %p218 = scmp.ne.s32.totalorder %s210, %s212
      %p219 = scmp.eq.s32.totalorder %s36, 1
      %p220 = por %p218, %p219
      %p221 = scmp.ne.s32.totalorder %s212, %s213
      %p222 = scmp.eq.s32.totalorder %s36, 0
      %p223 = por %p221, %p222
      %p224 = scmp.ne.s32.totalorder %s212, %s213
      %p225 = scmp.eq.s32.totalorder %s37, 1
      %p226 = por %p224, %p225
      %p228 = scmp.ne.s32.totalorder %s213, %s227
      %p229 = scmp.eq.s32.totalorder %s37, 0
      %p230 = por %p228, %p229
      %s232 = sadd.s32 %s231, 1
      %p235 = scmp.eq.s32.totalorder %s31, 1
      %p236 = scmp.ne.s32.totalorder %s231, %s233
      %p237 = scmp.eq.s32.totalorder %s31, 0
      %p238 = por %p236, %p237
      %p239 = scmp.ne.s32.totalorder %s231, %s233
      %p240 = scmp.eq.s32.totalorder %s36, 1
      %p241 = por %p239, %p240
      %p242 = scmp.ne.s32.totalorder %s233, %s234
      %p243 = scmp.eq.s32.totalorder %s36, 0
      %p244 = por %p242, %p243
      %p245 = scmp.ne.s32.totalorder %s233, %s234
      %p246 = scmp.eq.s32.totalorder %s37, 1
      %p247 = por %p245, %p246
      %p249 = scmp.ne.s32.totalorder %s234, %s248
      %p250 = scmp.eq.s32.totalorder %s37, 0
      %p251 = por %p249, %p250
      %s253 = sadd.s32 %s252, 1
      %p256 = scmp.eq.s32.totalorder %s31, 1
      %p257 = scmp.ne.s32.totalorder %s252, %s254
      %p258 = scmp.eq.s32.totalorder %s31, 0
      %p259 = por %p257, %p258
      %p260 = scmp.ne.s32.totalorder %s252, %s254
      %p261 = scmp.eq.s32.totalorder %s36, 1
      %p262 = por %p260, %p261
      %p263 = scmp.ne.s32.totalorder %s254, %s255
      %p264 = scmp.eq.s32.totalorder %s36, 0
      %p265 = por %p263, %p264
      %p266 = scmp.ne.s32.totalorder %s254, %s255
      %p267 = scmp.eq.s32.totalorder %s37, 1
      %p268 = por %p266, %p267
      %p270 = scmp.ne.s32.totalorder %s255, %s269
      %p271 = scmp.eq.s32.totalorder %s37, 0
      %p272 = por %p270, %p271
      %s273 = ssub.s32 %s38, %s50
      %s274 = ssub.s32 %s39, %s46
      %s275 = sor.u32 %s273, %s274
      %p276 = scmp.eq.s32.totalorder %s275, 0
      %s278 = sadd.s32 %s277, 1
      %s279 = scalar_select %p276, %s277, %s278
      %p282 = pneg %p276
      %p283 = scmp.eq.s32.totalorder %s31, 1
      %p284 = por %p282, %p283
      %p285 = scmp.ne.s32.totalorder %s277, %s280
      %p286 = scmp.eq.s32.totalorder %s31, 0
      %p287 = por %p285, %p286
      %p288 = scmp.ne.s32.totalorder %s277, %s280
      %p289 = scmp.eq.s32.totalorder %s36, 1
      %p290 = por %p288, %p289
      %p291 = scmp.ne.s32.totalorder %s280, %s281
      %p292 = scmp.eq.s32.totalorder %s36, 0
      %p293 = por %p291, %p292
      %p294 = scmp.ne.s32.totalorder %s280, %s281
      %p295 = scmp.eq.s32.totalorder %s37, 1
      %p296 = por %p294, %p295
      %p298 = scmp.ne.s32.totalorder %s281, %s297
      %p299 = scmp.eq.s32.totalorder %s37, 0
      %p300 = por %p298, %p299
      %p301 = scmp.le.s32.totalorder 1, %s31
      %p302 = scmp.lt.s32.totalorder %s31, 3
      %p303 = pnand %p301, %p302
      %p304 = pneg %p303
      // Predicated region
      $region9: #{tpu_custom_call.1} parent=5 // pred_check
        _
      $region10: #{tpu_custom_call.1} parent=5 // pred_check_branch
        %306 = sbr.rel (%p303) target = $region12
      $region11: #{tpu_custom_call.1} parent=5 // pred_region
        %s307 = ssub.s32 %s31, 1
        // Predicated region
        $region13: #{tpu_custom_call.1} parent=11 // pred_check
          %p308 = pneg %p118
        $region14: #{tpu_custom_call.1} parent=11 // pred_check_branch
          %310 = sbr.rel (%p308) target = $region16
        $region15: #{tpu_custom_call.1} parent=11 // pred_region
          %s312 = ssub.s32 256, 256
          %313 = vsyncadd [#allocation8], %s312
          %s314 = sshll.u32 [#allocation9], 4
          %s315 = int_to_ptr.vmem [resolvable:$true] %s314
          %320 = dma.hbm_to_vmem [thread:$0]  %s3, 256, %s315, [#allocation8], 64, 64, 4
        $region16: #{tpu_custom_call.1} parent=11 // pred_fallthru
          _
        // Predicated region
        $region17: #{tpu_custom_call.1} parent=11 // pred_check
          %p321 = pneg %p139
        $region18: #{tpu_custom_call.1} parent=11 // pred_check_branch
          %323 = sbr.rel (%p321) target = $region20
        $region19: #{tpu_custom_call.1} parent=11 // pred_region
          _
        $region20: #{tpu_custom_call.1} parent=11 // pred_fallthru
          _
        // Predicated region
        $region21: #{tpu_custom_call.1} parent=11 // pred_check
          %p324 = pneg %p160
        $region22: #{tpu_custom_call.1} parent=11 // pred_check_branch
          %326 = sbr.rel (%p324) target = $region24
        $region23: #{tpu_custom_call.1} parent=11 // pred_region
          %s328 = ssub.s32 256, 256
          %329 = vsyncadd [#allocation11], %s328
          %s330 = sshll.u32 [#allocation10], 4
          %s331 = int_to_ptr.vmem [resolvable:$true] %s330
          %336 = dma.hbm_to_vmem [thread:$0]  %s5, 256, %s331, [#allocation11], 64, 64, 4
        $region24: #{tpu_custom_call.1} parent=11 // pred_fallthru
          _
        // Predicated region
        $region25: #{tpu_custom_call.1} parent=11 // pred_check
          %p337 = pneg %p181
        $region26: #{tpu_custom_call.1} parent=11 // pred_check_branch
          %339 = sbr.rel (%p337) target = $region28
        $region27: #{tpu_custom_call.1} parent=11 // pred_region
          _
        $region28: #{tpu_custom_call.1} parent=11 // pred_fallthru
          _
        // Predicated region
        $region29: #{tpu_custom_call.1} parent=11 // pred_check
          %p340 = pneg %p202
        $region30: #{tpu_custom_call.1} parent=11 // pred_check_branch
          %342 = sbr.rel (%p340) target = $region32
        $region31: #{tpu_custom_call.1} parent=11 // pred_region
          %s344 = ssub.s32 256, 256
          %345 = vsyncadd [#allocation11], %s344
          %s346 = sshll.u32 [#allocation12], 4
          %s347 = int_to_ptr.vmem [resolvable:$true] %s346
          %352 = dma.hbm_to_vmem [thread:$0]  %s7, 256, %s347, [#allocation11], 64, 64, 4
        $region32: #{tpu_custom_call.1} parent=11 // pred_fallthru
          _
        // Predicated region
        $region33: #{tpu_custom_call.1} parent=11 // pred_check
          %p353 = pneg %p223
        $region34: #{tpu_custom_call.1} parent=11 // pred_check_branch
          %355 = sbr.rel (%p353) target = $region36
        $region35: #{tpu_custom_call.1} parent=11 // pred_region
          _
        $region36: #{tpu_custom_call.1} parent=11 // pred_fallthru
          _
        // Predicated region
        $region37: #{tpu_custom_call.1} parent=11 // pred_check
          %p356 = pneg %p244
        $region38: #{tpu_custom_call.1} parent=11 // pred_check_branch
          %358 = sbr.rel (%p356) target = $region40
        $region39: #{tpu_custom_call.1} parent=11 // pred_region
          _
        $region40: #{tpu_custom_call.1} parent=11 // pred_fallthru
          _
        // Predicated region
        $region41: #{tpu_custom_call.1} parent=11 // pred_check
          %p359 = pneg %p265
        $region42: #{tpu_custom_call.1} parent=11 // pred_check_branch
          %361 = sbr.rel (%p359) target = $region44
        $region43: #{tpu_custom_call.1} parent=11 // pred_region
          _
        $region44: #{tpu_custom_call.1} parent=11 // pred_fallthru
          _
      $region12: #{tpu_custom_call.1} parent=5 // pred_fallthru
        _
      %p362 = scmp.lt.s32.totalorder %s31, 2
      // Predicated region
      $region45: #{tpu_custom_call.1} parent=5 // pred_check
        %p363 = pneg %p362
      $region46: #{tpu_custom_call.1} parent=5 // pred_check_branch
        %365 = sbr.rel (%p363) target = $region48
      $region47: #{tpu_custom_call.1} parent=5 // pred_region
        // Predicated region
        $region49: #{tpu_custom_call.1} parent=47 // pred_check
          %p366 = pneg %p65
        $region50: #{tpu_custom_call.1} parent=47 // pred_check_branch
          %368 = sbr.rel (%p366) target = $region52
        $region51: #{tpu_custom_call.1} parent=47 // pred_region
          %s369 = sand.u32 %s55, 1
          %s370 = scalar_lea.sflag [#allocation5], %s369
          %s371 = sand.u32 %s55, 1
          %s372 = smul.addr %s371, 8
          %s373 = scalar_lea.vmem [#allocation4], %s372
          %s375 = ssub.s32 128, 128
          %376 = vsyncadd %s370, %s375
          %s377 = sadd.s32 %s39, %s38
          %s378 = smul.addr %s377, 128
          %s379 = scalar_lea.hbm %s1, %s378
          %s381 = sshll.u32 %s373, 4
          %s382 = int_to_ptr.vmem [resolvable:$true] %s381
          %384 = dma.hbm_to_vmem [thread:$0]  %s379, 128, %s382, %s370
        $region52: #{tpu_custom_call.1} parent=47 // pred_fallthru
          _
        // Predicated region
        $region53: #{tpu_custom_call.1} parent=47 // pred_check
          %p385 = pneg %p91
        $region54: #{tpu_custom_call.1} parent=47 // pred_check_branch
          %387 = sbr.rel (%p385) target = $region56
        $region55: #{tpu_custom_call.1} parent=47 // pred_region
          %s388 = sand.u32 %s31, 1
          %s389 = scalar_lea.sflag [#allocation8], %s388
          %s390 = sand.u32 %s81, 1
          %s391 = smul.addr %s390, 8
          %s392 = scalar_lea.vmem [#allocation7], %s391
          %s394 = ssub.s32 128, 128
          %395 = vsyncadd %s389, %s394
          %s396 = smul.addr %s38, 128
          %s397 = scalar_lea.hbm %s2, %s396
          %s399 = sshll.u32 %s392, 4
          %s400 = int_to_ptr.vmem [resolvable:$true] %s399
          %402 = dma.hbm_to_vmem [thread:$0]  %s397, 128, %s400, %s389
        $region56: #{tpu_custom_call.1} parent=47 // pred_fallthru
          _
      $region48: #{tpu_custom_call.1} parent=5 // pred_fallthru
        _
      %p403 = scmp.le.s32.totalorder 1, %s31
      %p404 = scmp.lt.s32.totalorder %s31, 3
      %p405 = pnand %p403, %p404
      %p406 = pneg %p405
      // Predicated region
      $region57: #{tpu_custom_call.1} parent=5 // pred_check
        _
      $region58: #{tpu_custom_call.1} parent=5 // pred_check_branch
        %408 = sbr.rel (%p405) target = $region60
      $region59: #{tpu_custom_call.1} parent=5 // pred_region
        %s409 = ssub.s32 %s31, 1
        %s410 = sand.u32 %s58, 1
        %s411 = scalar_lea.sflag [#allocation5], %s410
        %s412 = sand.u32 %s58, 1
        %s413 = smul.addr %s412, 8
        %s414 = scalar_lea.vmem [#allocation4], %s413
        // Predicated region
        $region61: #{tpu_custom_call.1} parent=59 // pred_check
          %p415 = pneg %p71
        $region62: #{tpu_custom_call.1} parent=59 // pred_check_branch
          %417 = sbr.rel (%p415) target = $region64
        $region63: #{tpu_custom_call.1} parent=59 // pred_region
          %418 = dma.done %s411, 128
        $region64: #{tpu_custom_call.1} parent=59 // pred_fallthru
          _
        %s419 = sand.u32 %s36, 1
        %s420 = scalar_lea.sflag [#allocation8], %s419
        %s421 = sand.u32 %s84, 1
        %s422 = smul.addr %s421, 8
        %s423 = scalar_lea.vmem [#allocation7], %s422
        // Predicated region
        $region65: #{tpu_custom_call.1} parent=59 // pred_check
          %p424 = pneg %p97
        $region66: #{tpu_custom_call.1} parent=59 // pred_check_branch
          %426 = sbr.rel (%p424) target = $region68
        $region67: #{tpu_custom_call.1} parent=59 // pred_region
          %427 = dma.done %s420, 128
        $region68: #{tpu_custom_call.1} parent=59 // pred_fallthru
          _
        // Predicated region
        $region69: #{tpu_custom_call.1} parent=59 // pred_check
          %p428 = pneg %p118
        $region70: #{tpu_custom_call.1} parent=59 // pred_check_branch
          %430 = sbr.rel (%p428) target = $region72
        $region71: #{tpu_custom_call.1} parent=59 // pred_region
          %431 = dma.done [#allocation8], 256
        $region72: #{tpu_custom_call.1} parent=59 // pred_fallthru
          _
        // Predicated region
        $region73: #{tpu_custom_call.1} parent=59 // pred_check
          %p432 = pneg %p160
        $region74: #{tpu_custom_call.1} parent=59 // pred_check_branch
          %434 = sbr.rel (%p432) target = $region76
        $region75: #{tpu_custom_call.1} parent=59 // pred_region
          %435 = dma.done [#allocation11], 256
        $region76: #{tpu_custom_call.1} parent=59 // pred_fallthru
          _
        // Predicated region
        $region77: #{tpu_custom_call.1} parent=59 // pred_check
          %p436 = pneg %p202
        $region78: #{tpu_custom_call.1} parent=59 // pred_check_branch
          %438 = sbr.rel (%p436) target = $region80
        $region79: #{tpu_custom_call.1} parent=59 // pred_region
          %439 = dma.done [#allocation11], 256
        $region80: #{tpu_custom_call.1} parent=59 // pred_fallthru
          _
        %s440 = sand.u32 %s58, 1
        %s441 = scalar_lea.sflag [#allocation5], %s440
        %s442 = sand.u32 %s58, 1
        %s443 = smul.addr %s442, 8
        %s444 = scalar_lea.vmem [#allocation4], %s443
        %p445 = pneg %p71
        %p446 = pneg %p68
        %s447 = sand.u32 %s36, 1
        %s448 = scalar_lea.sflag [#allocation8], %s447
        %s449 = sand.u32 %s84, 1
        %s450 = smul.addr %s449, 8
        %s451 = scalar_lea.vmem [#allocation7], %s450
        %p452 = pneg %p97
        %p453 = pneg %p94
        %p454 = pneg %p118
        %p455 = pneg %p115
        %p456 = pneg %p139
        %p457 = pneg %p136
        %p458 = pneg %p160
        %p459 = pneg %p157
        %p460 = pneg %p181
        %p461 = pneg %p178
        %p462 = pneg %p202
        %p463 = pneg %p199
        %p464 = pneg %p223
        %p465 = pneg %p220
        %p466 = pneg %p244
        %p467 = pneg %p241
        %p468 = pneg %p265
        %p469 = pneg %p262
        %p470 = pneg %p293
        %p471 = pneg %p290
        %s472 = sand.u32 %s280, 1
        %s473 = scalar_lea.sflag [#allocation6], %s472
        %s474 = sand.u32 %s280, 1
        %s475 = smul.addr %s474, 8
        %s476 = scalar_lea.vmem [#allocation13], %s475
        %v478 = vld [vmem:[%s414] sm:$0xff]
        %v479 = vld [vmem:[%s423] sm:$0xff]
        %v480 = vpack.c.bf16 %v478, %v478
        %v481 = vld [vmem:[#allocation9] sm:$0xf]
        %v482 = vld [vmem:[#allocation9 + $0x4] sm:$0xf]
        %v483 = vld [vmem:[#allocation9 + $0x8] sm:$0xf]
        %v484 = vld [vmem:[#allocation9 + $0xc] sm:$0xf]
        %v485 = vld [vmem:[%s4] sm:$0x1]
        %v487 = vlaneseq
        %v488 = vshrl.u32 %v487, 7
        %v489 = vsub.s32 0, %v488
        %v490 = vrot.slane %v485, %v489
        %v496 = vunpack.c.l.b16 %v481
        %v497 = vunpack.c.l.b16 %v482
        %v498 = vunpack.c.l.b16 %v483
        %v499 = vunpack.c.l.b16 %v484
        %v500 = vpack.c.b16 %v497, %v496
        %v501 = vpack.c.b16 %v499, %v498
        %vm504 = vcmask 261120
        %v506 = vsel %vm504, %v480, 0
        %508 = vmatprep.subr.bf16.mxu0 0
        %509 = vmatpush1.bf16.msra.mxu0 0
        %510 = vmatprep.subr.bf16.mxu0 0
        %511 = vmatpush1.bf16.msra.mxu0 0
        %512 = vmatprep.subr.bf16.mxu0 0
        %513 = vmatpush1.bf16.msra.mxu0 0
        %514 = vmatprep.subr.bf16.mxu0 0
        %515 = vmatpush1.bf16.msra.mxu0 0
        %516 = vmatprep.subr.bf16.mxu0 0
        %517 = vmatpush1.bf16.msra.mxu0 0
        %518 = vmatprep.subr.bf16.mxu0 0
        %519 = vmatpush1.bf16.msra.mxu0 0
        %520 = vmatprep.subr.bf16.mxu0 0
        %521 = vmatpush1.bf16.msra.mxu0 %v501
        %522 = vmatprep.subr.bf16.mxu0 0
        %523 = vmatpush1.bf16.msra.mxu0 %v500
        %524 = vmatprep.subr.bf16.mxu0 0
        %525 = vmatpush2.bf16.msra.mxu0 0
        %526 = vmatprep.subr.bf16.mxu0 0
        %527 = vmatpush2.bf16.msra.mxu0 0
        %528 = vmatprep.subr.bf16.mxu0 0
        %529 = vmatpush2.bf16.msra.mxu0 0
        %530 = vmatprep.subr.bf16.mxu0 0
        %531 = vmatpush2.bf16.msra.mxu0 0
        %532 = vmatprep.subr.bf16.mxu0 0
        %533 = vmatpush2.bf16.msra.mxu0 0
        %534 = vmatprep.subr.bf16.mxu0 0
        %535 = vmatpush2.bf16.msra.mxu0 0
        %536 = vmatprep.subr.bf16.mxu0 0
        %537 = vmatpush2.bf16.msra.mxu0 0
        %538 = vmatprep.subr.bf16.mxu0 0
        %539 = vmatpush2.bf16.msra.mxu0 0
        %540 = vmatprep.mubr.bf16.mxu0 0
        %541 = vmatmul.mubr.bf16.gmra.mxu0 %v506
        %v542 = vpop.f32.mrf.mxu0
        %v543 = vadd.f32 %v490, %v542
        %v544 = vpop.f32.mrf.mxu0
        %v545 = vpop.f32.mrf.mxu0
        %v546 = vpop.f32.mrf.mxu0
        %547 = vdwg.mxu0
        %v548 = vpack.c.bf16 %v479, %v479
        %v549 = vld [vmem:[#allocation10] sm:$0xf]
        %v550 = vld [vmem:[#allocation10 + $0x4] sm:$0xf]
        %v551 = vld [vmem:[#allocation10 + $0x8] sm:$0xf]
        %v552 = vld [vmem:[#allocation10 + $0xc] sm:$0xf]
        %v553 = vld [vmem:[%s6] sm:$0x1]
        %v555 = vlaneseq
        %v556 = vshrl.u32 %v555, 7
        %v557 = vsub.s32 0, %v556
        %v558 = vrot.slane %v553, %v557
        %v564 = vunpack.c.l.b16 %v549
        %v565 = vunpack.c.l.b16 %v550
        %v566 = vunpack.c.l.b16 %v551
        %v567 = vunpack.c.l.b16 %v552
        %v568 = vpack.c.b16 %v565, %v564
        %v569 = vpack.c.b16 %v567, %v566
        %v573 = vsel %vm504, %v548, 0
        %575 = vmatprep.subr.bf16.mxu0 0
        %576 = vmatpush1.bf16.msra.mxu0 0
        %577 = vmatprep.subr.bf16.mxu0 0
        %578 = vmatpush1.bf16.msra.mxu0 0
        %579 = vmatprep.subr.bf16.mxu0 0
        %580 = vmatpush1.bf16.msra.mxu0 0
        %581 = vmatprep.subr.bf16.mxu0 0
        %582 = vmatpush1.bf16.msra.mxu0 0
        %583 = vmatprep.subr.bf16.mxu0 0
        %584 = vmatpush1.bf16.msra.mxu0 0
        %585 = vmatprep.subr.bf16.mxu0 0
        %586 = vmatpush1.bf16.msra.mxu0 0
        %587 = vmatprep.subr.bf16.mxu0 0
        %588 = vmatpush1.bf16.msra.mxu0 %v569
        %589 = vmatprep.subr.bf16.mxu0 0
        %590 = vmatpush1.bf16.msra.mxu0 %v568
        %591 = vmatprep.subr.bf16.mxu0 0
        %592 = vmatpush2.bf16.msra.mxu0 0
        %593 = vmatprep.subr.bf16.mxu0 0
        %594 = vmatpush2.bf16.msra.mxu0 0
        %595 = vmatprep.subr.bf16.mxu0 0
        %596 = vmatpush2.bf16.msra.mxu0 0
        %597 = vmatprep.subr.bf16.mxu0 0
        %598 = vmatpush2.bf16.msra.mxu0 0
        %599 = vmatprep.subr.bf16.mxu0 0
        %600 = vmatpush2.bf16.msra.mxu0 0
        %601 = vmatprep.subr.bf16.mxu0 0
        %602 = vmatpush2.bf16.msra.mxu0 0
        %603 = vmatprep.subr.bf16.mxu0 0
        %604 = vmatpush2.bf16.msra.mxu0 0
        %605 = vmatprep.subr.bf16.mxu0 0
        %606 = vmatpush2.bf16.msra.mxu0 0
        %607 = vmatprep.mubr.bf16.mxu0 0
        %608 = vmatmul.mubr.bf16.gmra.mxu0 %v573
        %v609 = vpop.f32.mrf.mxu0
        %v610 = vadd.f32 %v558, %v609
        %v611 = vpop.f32.mrf.mxu0
        %v612 = vpop.f32.mrf.mxu0
        %v613 = vpop.f32.mrf.mxu0
        %614 = vdwg.mxu0
        %v615 = vlaneseq
        %v616 = vand.u32 %v615, 127
        %s617 = sld [smem:[#allocation3 + %s40]]
        %v618 = vstv %s617
        %vm619 = vcmp.lt.s32.totalorder %v616, %v618
        %v620 = vpack.c.bf16 %v543, %v543
        %v621 = vpack.c.bf16 %v610, %v610
        %vm622 = vcmask 64512
        %v624 = vsel %vm622, %v620, 0
        %v627 = vsel %vm622, %v621, 0
        %629 = vmatprep.subr.bf16.mxu0 0
        %630 = vmatpush1.bf16.xpose.msra.mxu0 0
        %631 = vmatprep.subr.bf16.mxu0 0
        %632 = vmatpush1.bf16.xpose.msra.mxu0 0
        %633 = vmatprep.subr.bf16.mxu0 0
        %634 = vmatpush1.bf16.xpose.msra.mxu0 0
        %635 = vmatprep.subr.bf16.mxu0 0
        %636 = vmatpush1.bf16.xpose.msra.mxu0 0
        %637 = vmatprep.subr.bf16.mxu0 0
        %638 = vmatpush1.bf16.xpose.msra.mxu0 0
        %639 = vmatprep.subr.bf16.mxu0 0
        %640 = vmatpush1.bf16.xpose.msra.mxu0 0
        %641 = vmatprep.subr.bf16.mxu0 0
        %642 = vmatpush1.bf16.xpose.msra.mxu0 0
        %643 = vmatprep.subr.bf16.mxu0 0
        %644 = vmatpush1.bf16.xpose.msra.mxu0 %v627
        %645 = vmatprep.subr.bf16.mxu0 0
        %646 = vmatpush2.bf16.xpose.msra.mxu0 0
        %647 = vmatprep.subr.bf16.mxu0 0
        %648 = vmatpush2.bf16.xpose.msra.mxu0 0
        %649 = vmatprep.subr.bf16.mxu0 0
        %650 = vmatpush2.bf16.xpose.msra.mxu0 0
        %651 = vmatprep.subr.bf16.mxu0 0
        %652 = vmatpush2.bf16.xpose.msra.mxu0 0
        %653 = vmatprep.subr.bf16.mxu0 0
        %654 = vmatpush2.bf16.xpose.msra.mxu0 0
        %655 = vmatprep.subr.bf16.mxu0 0
        %656 = vmatpush2.bf16.xpose.msra.mxu0 0
        %657 = vmatprep.subr.bf16.mxu0 0
        %658 = vmatpush2.bf16.xpose.msra.mxu0 0
        %659 = vmatprep.subr.bf16.mxu0 0
        %660 = vmatpush2.bf16.xpose.msra.mxu0 0
        %661 = vmatprep.mubr.bf16.mxu0 0
        %662 = vmatmul.mubr.bf16.gmra.mxu0 %v624
        %v663 = vpop.f32.mrf.mxu0
        %v664 = vadd.f32 0.0, %v663
        %v665 = vpop.f32.mrf.mxu0
        %v666 = vpop.f32.mrf.mxu0
        %v667 = vpop.f32.mrf.mxu0
        %668 = vdwg.mxu0
        %v669 = vmul.f32 %v664, 0.35355338
        %v670 = vsel %vm619, %v669, -1e+09
        %v671 = vsel %vm622, %v670, -inf
        %672 = vmax.xlane.f32.xlu0 %v671
        %v673 = vpop.xlane.xlu0 %672
        %v674 = vsub.f32 %v670, %v673
        %v675 = vmul.f32 %v674, 1.442695
        %v676 = vpow.pop %v675
        %v677 = vsel %vm622, %v676, 0.0
        %678 = vadd.xlane.f32.xlu0 %v677
        %v679 = vpop.xlane.xlu0 %678
        %v680 = vrcp.pop %v679
        %v681 = vmul.f32 %v676, %v680
        %vm682 = vcmp.ge.s32.totalorder %v616, 0
        %vm683 = vcmp.lt.s32.totalorder %v616, 8
        %vm684 = vmand %vm682, %vm683
        %686 = vrot.lane.b32.xlu0 %v610, 96
        %v687 = vpop.permute.xlu0 %686
        %v689 = vsel %vm684, %v687, 0.0
        %v690 = vpack.c.bf16 %v681, %v681
        %v691 = vpack.c.bf16 %v689, %v689
        %693 = vrot.lane.b32.xlu0 %v620, 120
        %v694 = vpop.permute.xlu0 %693
        %696 = vrot.lane.b32.xlu0 %v621, 120
        %v697 = vpop.permute.xlu0 %696
        %v699 = vsel %vm622, %v694, 0
        %v702 = vsel %vm622, %v697, 0
        %704 = vmatprep.subr.bf16.mxu0 0
        %705 = vmatpush1.bf16.xpose.msra.mxu0 0
        %706 = vmatprep.subr.bf16.mxu0 0
        %707 = vmatpush1.bf16.xpose.msra.mxu0 0
        %708 = vmatprep.subr.bf16.mxu0 0
        %709 = vmatpush1.bf16.xpose.msra.mxu0 0
        %710 = vmatprep.subr.bf16.mxu0 0
        %711 = vmatpush1.bf16.xpose.msra.mxu0 0
        %712 = vmatprep.subr.bf16.mxu0 0
        %713 = vmatpush1.bf16.xpose.msra.mxu0 0
        %714 = vmatprep.subr.bf16.mxu0 0
        %715 = vmatpush1.bf16.xpose.msra.mxu0 0
        %716 = vmatprep.subr.bf16.mxu0 0
        %717 = vmatpush1.bf16.xpose.msra.mxu0 0
        %718 = vmatprep.subr.bf16.mxu0 0
        %719 = vmatpush1.bf16.xpose.msra.mxu0 %v702
        %720 = vmatprep.subr.bf16.mxu0 0
        %721 = vmatpush2.bf16.xpose.msra.mxu0 0
        %722 = vmatprep.subr.bf16.mxu0 0
        %723 = vmatpush2.bf16.xpose.msra.mxu0 0
        %724 = vmatprep.subr.bf16.mxu0 0
        %725 = vmatpush2.bf16.xpose.msra.mxu0 0
        %726 = vmatprep.subr.bf16.mxu0 0
        %727 = vmatpush2.bf16.xpose.msra.mxu0 0
        %728 = vmatprep.subr.bf16.mxu0 0
        %729 = vmatpush2.bf16.xpose.msra.mxu0 0
        %730 = vmatprep.subr.bf16.mxu0 0
        %731 = vmatpush2.bf16.xpose.msra.mxu0 0
        %732 = vmatprep.subr.bf16.mxu0 0
        %733 = vmatpush2.bf16.xpose.msra.mxu0 0
        %734 = vmatprep.subr.bf16.mxu0 0
        %735 = vmatpush2.bf16.xpose.msra.mxu0 0
        %736 = vmatprep.mubr.bf16.mxu0 0
        %737 = vmatmul.mubr.bf16.gmra.mxu0 %v699
        %v738 = vpop.f32.mrf.mxu0
        %v739 = vadd.f32 0.0, %v738
        %v740 = vpop.f32.mrf.mxu0
        %v741 = vpop.f32.mrf.mxu0
        %v742 = vpop.f32.mrf.mxu0
        %743 = vdwg.mxu0
        %v744 = vmul.f32 %v739, 0.35355338
        %v745 = vsel %vm619, %v744, -1e+09
        %v746 = vsel %vm622, %v745, -inf
        %747 = vmax.xlane.f32.xlu0 %v746
        %v748 = vpop.xlane.xlu0 %747
        %v749 = vsub.f32 %v745, %v748
        %v750 = vmul.f32 %v749, 1.442695
        %v751 = vpow.pop %v750
        %v752 = vsel %vm622, %v751, 0.0
        %753 = vadd.xlane.f32.xlu0 %v752
        %v754 = vpop.xlane.xlu0 %753
        %v755 = vrcp.pop %v754
        %v756 = vmul.f32 %v751, %v755
        %vm757 = vcmp.ge.s32.totalorder %v616, 8
        %vm758 = vcmp.lt.s32.totalorder %v616, 16
        %vm759 = vmand %vm757, %vm758
        %v760 = vsel %vm759, %v687, 0.0
        %v761 = vpack.c.bf16 %v756, %v756
        %v762 = vpack.c.bf16 %v760, %v760
        %v764 = vsel %vm622, %v761, 0
        %vm766 = vcmask 1043456
        %v768 = vsel %vm766, %v762, 0
        %770 = vmatprep.subr.bf16.mxu0 0
        %771 = vmatpush1.bf16.msra.mxu0 0
        %772 = vmatprep.subr.bf16.mxu0 0
        %773 = vmatpush1.bf16.msra.mxu0 0
        %774 = vmatprep.subr.bf16.mxu0 0
        %775 = vmatpush1.bf16.msra.mxu0 0
        %776 = vmatprep.subr.bf16.mxu0 0
        %777 = vmatpush1.bf16.msra.mxu0 0
        %778 = vmatprep.subr.bf16.mxu0 0
        %779 = vmatpush1.bf16.msra.mxu0 0
        %780 = vmatprep.subr.bf16.mxu0 0
        %781 = vmatpush1.bf16.msra.mxu0 0
        %782 = vmatprep.subr.bf16.mxu0 0
        %783 = vmatpush1.bf16.msra.mxu0 0
        %784 = vmatprep.subr.bf16.mxu0 0
        %785 = vmatpush1.bf16.msra.mxu0 %v768
        %786 = vmatprep.subr.bf16.mxu0 0
        %787 = vmatpush2.bf16.msra.mxu0 0
        %788 = vmatprep.subr.bf16.mxu0 0
        %789 = vmatpush2.bf16.msra.mxu0 0
        %790 = vmatprep.subr.bf16.mxu0 0
        %791 = vmatpush2.bf16.msra.mxu0 0
        %792 = vmatprep.subr.bf16.mxu0 0
        %793 = vmatpush2.bf16.msra.mxu0 0
        %794 = vmatprep.subr.bf16.mxu0 0
        %795 = vmatpush2.bf16.msra.mxu0 0
        %796 = vmatprep.subr.bf16.mxu0 0
        %797 = vmatpush2.bf16.msra.mxu0 0
        %798 = vmatprep.subr.bf16.mxu0 0
        %799 = vmatpush2.bf16.msra.mxu0 0
        %800 = vmatprep.subr.bf16.mxu0 0
        %801 = vmatpush2.bf16.msra.mxu0 0
        %802 = vmatprep.mubr.bf16.mxu0 0
        %803 = vmatmul.mubr.bf16.gmra.mxu0 %v764
        %v804 = vpop.f32.mrf.mxu0
        %v805 = vadd.f32 0.0, %v804
        %v806 = vpop.f32.mrf.mxu0
        %v807 = vpop.f32.mrf.mxu0
        %v808 = vpop.f32.mrf.mxu0
        %809 = vdwg.mxu0
        %v811 = vsel %vm622, %v690, 0
        %v814 = vsel %vm766, %v691, 0
        %816 = vmatprep.subr.bf16.mxu0 0
        %817 = vmatpush1.bf16.msra.mxu0 0
        %818 = vmatprep.subr.bf16.mxu0 0
        %819 = vmatpush1.bf16.msra.mxu0 0
        %820 = vmatprep.subr.bf16.mxu0 0
        %821 = vmatpush1.bf16.msra.mxu0 0
        %822 = vmatprep.subr.bf16.mxu0 0
        %823 = vmatpush1.bf16.msra.mxu0 0
        %824 = vmatprep.subr.bf16.mxu0 0
        %825 = vmatpush1.bf16.msra.mxu0 0
        %826 = vmatprep.subr.bf16.mxu0 0
        %827 = vmatpush1.bf16.msra.mxu0 0
        %828 = vmatprep.subr.bf16.mxu0 0
        %829 = vmatpush1.bf16.msra.mxu0 0
        %830 = vmatprep.subr.bf16.mxu0 0
        %831 = vmatpush1.bf16.msra.mxu0 %v814
        %832 = vmatprep.subr.bf16.mxu0 0
        %833 = vmatpush2.bf16.msra.mxu0 0
        %834 = vmatprep.subr.bf16.mxu0 0
        %835 = vmatpush2.bf16.msra.mxu0 0
        %836 = vmatprep.subr.bf16.mxu0 0
        %837 = vmatpush2.bf16.msra.mxu0 0
        %838 = vmatprep.subr.bf16.mxu0 0
        %839 = vmatpush2.bf16.msra.mxu0 0
        %840 = vmatprep.subr.bf16.mxu0 0
        %841 = vmatpush2.bf16.msra.mxu0 0
        %842 = vmatprep.subr.bf16.mxu0 0
        %843 = vmatpush2.bf16.msra.mxu0 0
        %844 = vmatprep.subr.bf16.mxu0 0
        %845 = vmatpush2.bf16.msra.mxu0 0
        %846 = vmatprep.subr.bf16.mxu0 0
        %847 = vmatpush2.bf16.msra.mxu0 0
        %848 = vmatprep.mubr.bf16.mxu0 0
        %849 = vmatmul.mubr.bf16.gmra.mxu0 %v811
        %v850 = vpop.f32.mrf.mxu0
        %v851 = vadd.f32 %v805, %v850
        %v852 = vpop.f32.mrf.mxu0
        %v853 = vpop.f32.mrf.mxu0
        %v854 = vpop.f32.mrf.mxu0
        %855 = vdwg.mxu0
        %856 = vrot.lane.b32.xlu0 %v620, 112
        %v857 = vpop.permute.xlu0 %856
        %858 = vrot.lane.b32.xlu0 %v621, 112
        %v859 = vpop.permute.xlu0 %858
        %v861 = vsel %vm622, %v857, 0
        %v864 = vsel %vm622, %v859, 0
        %866 = vmatprep.subr.bf16.mxu0 0
        %867 = vmatpush1.bf16.xpose.msra.mxu0 0
        %868 = vmatprep.subr.bf16.mxu0 0
        %869 = vmatpush1.bf16.xpose.msra.mxu0 0
        %870 = vmatprep.subr.bf16.mxu0 0
        %871 = vmatpush1.bf16.xpose.msra.mxu0 0
        %872 = vmatprep.subr.bf16.mxu0 0
        %873 = vmatpush1.bf16.xpose.msra.mxu0 0
        %874 = vmatprep.subr.bf16.mxu0 0
        %875 = vmatpush1.bf16.xpose.msra.mxu0 0
        %876 = vmatprep.subr.bf16.mxu0 0
        %877 = vmatpush1.bf16.xpose.msra.mxu0 0
        %878 = vmatprep.subr.bf16.mxu0 0
        %879 = vmatpush1.bf16.xpose.msra.mxu0 0
        %880 = vmatprep.subr.bf16.mxu0 0
        %881 = vmatpush1.bf16.xpose.msra.mxu0 %v864
        %882 = vmatprep.subr.bf16.mxu0 0
        %883 = vmatpush2.bf16.xpose.msra.mxu0 0
        %884 = vmatprep.subr.bf16.mxu0 0
        %885 = vmatpush2.bf16.xpose.msra.mxu0 0
        %886 = vmatprep.subr.bf16.mxu0 0
        %887 = vmatpush2.bf16.xpose.msra.mxu0 0
        %888 = vmatprep.subr.bf16.mxu0 0
        %889 = vmatpush2.bf16.xpose.msra.mxu0 0
        %890 = vmatprep.subr.bf16.mxu0 0
        %891 = vmatpush2.bf16.xpose.msra.mxu0 0
        %892 = vmatprep.subr.bf16.mxu0 0
        %893 = vmatpush2.bf16.xpose.msra.mxu0 0
        %894 = vmatprep.subr.bf16.mxu0 0
        %895 = vmatpush2.bf16.xpose.msra.mxu0 0
        %896 = vmatprep.subr.bf16.mxu0 0
        %897 = vmatpush2.bf16.xpose.msra.mxu0 0
        %898 = vmatprep.mubr.bf16.mxu0 0
        %899 = vmatmul.mubr.bf16.gmra.mxu0 %v861
        %v900 = vpop.f32.mrf.mxu0
        %v901 = vadd.f32 0.0, %v900
        %v902 = vpop.f32.mrf.mxu0
        %v903 = vpop.f32.mrf.mxu0
        %v904 = vpop.f32.mrf.mxu0
        %905 = vdwg.mxu0
        %v906 = vmul.f32 %v901, 0.35355338
        %v907 = vsel %vm619, %v906, -1e+09
        %v908 = vsel %vm622, %v907, -inf
        %909 = vmax.xlane.f32.xlu0 %v908
        %v910 = vpop.xlane.xlu0 %909
        %v911 = vsub.f32 %v907, %v910
        %v912 = vmul.f32 %v911, 1.442695
        %v913 = vpow.pop %v912
        %v914 = vsel %vm622, %v913, 0.0
        %915 = vadd.xlane.f32.xlu0 %v914
        %v916 = vpop.xlane.xlu0 %915
        %v917 = vrcp.pop %v916
        %v918 = vmul.f32 %v913, %v917
        %vm919 = vcmp.ge.s32.totalorder %v616, 16
        %vm920 = vcmp.lt.s32.totalorder %v616, 24
        %vm921 = vmand %vm919, %vm920
        %v922 = vsel %vm921, %v687, 0.0
        %v923 = vpack.c.bf16 %v918, %v918
        %v924 = vpack.c.bf16 %v922, %v922
        %v926 = vsel %vm622, %v923, 0
        %v929 = vsel %vm766, %v924, 0
        %931 = vmatprep.subr.bf16.mxu0 0
        %932 = vmatpush1.bf16.msra.mxu0 0
        %933 = vmatprep.subr.bf16.mxu0 0
        %934 = vmatpush1.bf16.msra.mxu0 0
        %935 = vmatprep.subr.bf16.mxu0 0
        %936 = vmatpush1.bf16.msra.mxu0 0
        %937 = vmatprep.subr.bf16.mxu0 0
        %938 = vmatpush1.bf16.msra.mxu0 0
        %939 = vmatprep.subr.bf16.mxu0 0
        %940 = vmatpush1.bf16.msra.mxu0 0
        %941 = vmatprep.subr.bf16.mxu0 0
        %942 = vmatpush1.bf16.msra.mxu0 0
        %943 = vmatprep.subr.bf16.mxu0 0
        %944 = vmatpush1.bf16.msra.mxu0 0
        %945 = vmatprep.subr.bf16.mxu0 0
        %946 = vmatpush1.bf16.msra.mxu0 %v929
        %947 = vmatprep.subr.bf16.mxu0 0
        %948 = vmatpush2.bf16.msra.mxu0 0
        %949 = vmatprep.subr.bf16.mxu0 0
        %950 = vmatpush2.bf16.msra.mxu0 0
        %951 = vmatprep.subr.bf16.mxu0 0
        %952 = vmatpush2.bf16.msra.mxu0 0
        %953 = vmatprep.subr.bf16.mxu0 0
        %954 = vmatpush2.bf16.msra.mxu0 0
        %955 = vmatprep.subr.bf16.mxu0 0
        %956 = vmatpush2.bf16.msra.mxu0 0
        %957 = vmatprep.subr.bf16.mxu0 0
        %958 = vmatpush2.bf16.msra.mxu0 0
        %959 = vmatprep.subr.bf16.mxu0 0
        %960 = vmatpush2.bf16.msra.mxu0 0
        %961 = vmatprep.subr.bf16.mxu0 0
        %962 = vmatpush2.bf16.msra.mxu0 0
        %963 = vmatprep.mubr.bf16.mxu0 0
        %964 = vmatmul.mubr.bf16.gmra.mxu0 %v926
        %v965 = vpop.f32.mrf.mxu0
        %v966 = vadd.f32 0.0, %v965
        %v967 = vpop.f32.mrf.mxu0
        %v968 = vpop.f32.mrf.mxu0
        %v969 = vpop.f32.mrf.mxu0
        %970 = vdwg.mxu0
        %v971 = vadd.f32 %v851, %v966
        %972 = vrot.lane.b32.xlu0 %v620, 104
        %v973 = vpop.permute.xlu0 %972
        %974 = vrot.lane.b32.xlu0 %v621, 104
        %v975 = vpop.permute.xlu0 %974
        %v977 = vsel %vm622, %v973, 0
        %v980 = vsel %vm622, %v975, 0
        %982 = vmatprep.subr.bf16.mxu0 0
        %983 = vmatpush1.bf16.xpose.msra.mxu0 0
        %984 = vmatprep.subr.bf16.mxu0 0
        %985 = vmatpush1.bf16.xpose.msra.mxu0 0
        %986 = vmatprep.subr.bf16.mxu0 0
        %987 = vmatpush1.bf16.xpose.msra.mxu0 0
        %988 = vmatprep.subr.bf16.mxu0 0
        %989 = vmatpush1.bf16.xpose.msra.mxu0 0
        %990 = vmatprep.subr.bf16.mxu0 0
        %991 = vmatpush1.bf16.xpose.msra.mxu0 0
        %992 = vmatprep.subr.bf16.mxu0 0
        %993 = vmatpush1.bf16.xpose.msra.mxu0 0
        %994 = vmatprep.subr.bf16.mxu0 0
        %995 = vmatpush1.bf16.xpose.msra.mxu0 0
        %996 = vmatprep.subr.bf16.mxu0 0
        %997 = vmatpush1.bf16.xpose.msra.mxu0 %v980
        %998 = vmatprep.subr.bf16.mxu0 0
        %999 = vmatpush2.bf16.xpose.msra.mxu0 0
        %1000 = vmatprep.subr.bf16.mxu0 0
        %1001 = vmatpush2.bf16.xpose.msra.mxu0 0
        %1002 = vmatprep.subr.bf16.mxu0 0
        %1003 = vmatpush2.bf16.xpose.msra.mxu0 0
        %1004 = vmatprep.subr.bf16.mxu0 0
        %1005 = vmatpush2.bf16.xpose.msra.mxu0 0
        %1006 = vmatprep.subr.bf16.mxu0 0
        %1007 = vmatpush2.bf16.xpose.msra.mxu0 0
        %1008 = vmatprep.subr.bf16.mxu0 0
        %1009 = vmatpush2.bf16.xpose.msra.mxu0 0
        %1010 = vmatprep.subr.bf16.mxu0 0
        %1011 = vmatpush2.bf16.xpose.msra.mxu0 0
        %1012 = vmatprep.subr.bf16.mxu0 0
        %1013 = vmatpush2.bf16.xpose.msra.mxu0 0
        %1014 = vmatprep.mubr.bf16.mxu0 0
        %1015 = vmatmul.mubr.bf16.gmra.mxu0 %v977
        %v1016 = vpop.f32.mrf.mxu0
        %v1017 = vadd.f32 0.0, %v1016
        %v1018 = vpop.f32.mrf.mxu0
        %v1019 = vpop.f32.mrf.mxu0
        %v1020 = vpop.f32.mrf.mxu0
        %1021 = vdwg.mxu0
        %v1022 = vmul.f32 %v1017, 0.35355338
        %v1023 = vsel %vm619, %v1022, -1e+09
        %v1024 = vsel %vm622, %v1023, -inf
        %1025 = vmax.xlane.f32.xlu0 %v1024
        %v1026 = vpop.xlane.xlu0 %1025
        %v1027 = vsub.f32 %v1023, %v1026
        %v1028 = vmul.f32 %v1027, 1.442695
        %v1029 = vpow.pop %v1028
        %v1030 = vsel %vm622, %v1029, 0.0
        %1031 = vadd.xlane.f32.xlu0 %v1030
        %v1032 = vpop.xlane.xlu0 %1031
        %v1033 = vrcp.pop %v1032
        %v1034 = vmul.f32 %v1029, %v1033
        %vm1035 = vcmp.ge.s32.totalorder %v616, 24
        %vm1036 = vcmp.lt.s32.totalorder %v616, 32
        %vm1037 = vmand %vm1035, %vm1036
        %v1038 = vsel %vm1037, %v687, 0.0
        %v1039 = vpack.c.bf16 %v1034, %v1034
        %v1040 = vpack.c.bf16 %v1038, %v1038
        %v1042 = vsel %vm622, %v1039, 0
        %v1045 = vsel %vm766, %v1040, 0
        %1047 = vmatprep.subr.bf16.mxu0 0
        %1048 = vmatpush1.bf16.msra.mxu0 0
        %1049 = vmatprep.subr.bf16.mxu0 0
        %1050 = vmatpush1.bf16.msra.mxu0 0
        %1051 = vmatprep.subr.bf16.mxu0 0
        %1052 = vmatpush1.bf16.msra.mxu0 0
        %1053 = vmatprep.subr.bf16.mxu0 0
        %1054 = vmatpush1.bf16.msra.mxu0 0
        %1055 = vmatprep.subr.bf16.mxu0 0
        %1056 = vmatpush1.bf16.msra.mxu0 0
        %1057 = vmatprep.subr.bf16.mxu0 0
        %1058 = vmatpush1.bf16.msra.mxu0 0
        %1059 = vmatprep.subr.bf16.mxu0 0
        %1060 = vmatpush1.bf16.msra.mxu0 0
        %1061 = vmatprep.subr.bf16.mxu0 0
        %1062 = vmatpush1.bf16.msra.mxu0 %v1045
        %1063 = vmatprep.subr.bf16.mxu0 0
        %1064 = vmatpush2.bf16.msra.mxu0 0
        %1065 = vmatprep.subr.bf16.mxu0 0
        %1066 = vmatpush2.bf16.msra.mxu0 0
        %1067 = vmatprep.subr.bf16.mxu0 0
        %1068 = vmatpush2.bf16.msra.mxu0 0
        %1069 = vmatprep.subr.bf16.mxu0 0
        %1070 = vmatpush2.bf16.msra.mxu0 0
        %1071 = vmatprep.subr.bf16.mxu0 0
        %1072 = vmatpush2.bf16.msra.mxu0 0
        %1073 = vmatprep.subr.bf16.mxu0 0
        %1074 = vmatpush2.bf16.msra.mxu0 0
        %1075 = vmatprep.subr.bf16.mxu0 0
        %1076 = vmatpush2.bf16.msra.mxu0 0
        %1077 = vmatprep.subr.bf16.mxu0 0
        %1078 = vmatpush2.bf16.msra.mxu0 0
        %1079 = vmatprep.mubr.bf16.mxu0 0
        %1080 = vmatmul.mubr.bf16.gmra.mxu0 %v1042
        %v1081 = vpop.f32.mrf.mxu0
        %v1082 = vadd.f32 0.0, %v1081
        %v1083 = vpop.f32.mrf.mxu0
        %v1084 = vpop.f32.mrf.mxu0
        %v1085 = vpop.f32.mrf.mxu0
        %1086 = vdwg.mxu0
        %v1087 = vadd.f32 %v971, %v1082
        %v1088 = vpack.c.bf16 %v1087, %v1087
        %v1089 = vld [vmem:[#allocation12] sm:$0xf]
        %v1090 = vld [vmem:[#allocation12 + $0x4] sm:$0xf]
        %v1091 = vld [vmem:[#allocation12 + $0x8] sm:$0xf]
        %v1092 = vld [vmem:[#allocation12 + $0xc] sm:$0xf]
        %v1093 = vld [vmem:[%s8] sm:$0x1]
        %v1095 = vlaneseq
        %v1096 = vshrl.u32 %v1095, 7
        %v1097 = vsub.s32 0, %v1096
        %v1098 = vrot.slane %v1093, %v1097
        %v1104 = vunpack.c.l.b16 %v1089
        %v1105 = vunpack.c.l.b16 %v1090
        %v1106 = vunpack.c.l.b16 %v1091
        %v1107 = vunpack.c.l.b16 %v1092
        %v1108 = vpack.c.b16 %v1105, %v1104
        %v1109 = vpack.c.b16 %v1107, %v1106
        %v1113 = vsel %vm504, %v1088, 0
        %1115 = vmatprep.subr.bf16.mxu0 0
        %1116 = vmatpush1.bf16.msra.mxu0 0
        %1117 = vmatprep.subr.bf16.mxu0 0
        %1118 = vmatpush1.bf16.msra.mxu0 0
        %1119 = vmatprep.subr.bf16.mxu0 0
        %1120 = vmatpush1.bf16.msra.mxu0 0
        %1121 = vmatprep.subr.bf16.mxu0 0
        %1122 = vmatpush1.bf16.msra.mxu0 0
        %1123 = vmatprep.subr.bf16.mxu0 0
        %1124 = vmatpush1.bf16.msra.mxu0 0
        %1125 = vmatprep.subr.bf16.mxu0 0
        %1126 = vmatpush1.bf16.msra.mxu0 0
        %1127 = vmatprep.subr.bf16.mxu0 0
        %1128 = vmatpush1.bf16.msra.mxu0 %v1109
        %1129 = vmatprep.subr.bf16.mxu0 0
        %1130 = vmatpush1.bf16.msra.mxu0 %v1108
        %1131 = vmatprep.subr.bf16.mxu0 0
        %1132 = vmatpush2.bf16.msra.mxu0 0
        %1133 = vmatprep.subr.bf16.mxu0 0
        %1134 = vmatpush2.bf16.msra.mxu0 0
        %1135 = vmatprep.subr.bf16.mxu0 0
        %1136 = vmatpush2.bf16.msra.mxu0 0
        %1137 = vmatprep.subr.bf16.mxu0 0
        %1138 = vmatpush2.bf16.msra.mxu0 0
        %1139 = vmatprep.subr.bf16.mxu0 0
        %1140 = vmatpush2.bf16.msra.mxu0 0
        %1141 = vmatprep.subr.bf16.mxu0 0
        %1142 = vmatpush2.bf16.msra.mxu0 0
        %1143 = vmatprep.subr.bf16.mxu0 0
        %1144 = vmatpush2.bf16.msra.mxu0 0
        %1145 = vmatprep.subr.bf16.mxu0 0
        %1146 = vmatpush2.bf16.msra.mxu0 0
        %1147 = vmatprep.mubr.bf16.mxu0 0
        %1148 = vmatmul.mubr.bf16.gmra.mxu0 %v1113
        %v1149 = vpop.f32.mrf.mxu0
        %v1150 = vadd.f32 %v1098, %v1149
        %v1151 = vpop.f32.mrf.mxu0
        %v1152 = vpop.f32.mrf.mxu0
        %v1153 = vpop.f32.mrf.mxu0
        %1154 = vdwg.mxu0
        %v1155 = vadd.f32 %v478, %v1150
        %v1156 = vsel %vm504, %v1155, 0.0
        %1157 = vadd.xlane.f32.xlu0 %v1156
        %v1158 = vpop.xlane.xlu0 %1157
        %v1159 = vrcp.pop 32.0
        %v1160 = vmul.f32 %v1158, %v1159
        %v1161 = vsub.f32 %v1155, %v1160
        %v1162 = vmul.f32 %v1161, %v1161
        %v1163 = vsel %vm504, %v1162, 0.0
        %1164 = vadd.xlane.f32.xlu0 %v1163
        %v1165 = vpop.xlane.xlu0 %1164
        %v1166 = vmul.f32 %v1165, %v1159
        %v1167 = vadd.f32 %v1166, 1e-05
        %v1168 = vrsqrt.pop %v1167
        %v1169 = vmul.f32 %v1161, %v1168
        %v1170 = vld [vmem:[%s9] sm:$0x1]
        %v1172 = vlaneseq
        %v1173 = vshrl.u32 %v1172, 7
        %v1174 = vsub.s32 0, %v1173
        %v1175 = vrot.slane %v1170, %v1174
        %v1177 = vmul.f32 %v1169, %v1175
        %v1178 = vld [vmem:[%s10] sm:$0x1]
        %v1180 = vlaneseq
        %v1181 = vshrl.u32 %v1180, 7
        %v1182 = vsub.s32 0, %v1181
        %v1183 = vrot.slane %v1178, %v1182
        %v1185 = vadd.f32 %v1177, %v1183
        %1186 = vst.msk [vmem:[%s476] sm:$0xff] %vm504, %v1185
        %s1187 = sand.u32 %s280, 1
        %s1188 = scalar_lea.sflag [#allocation6], %s1187
        %s1189 = sand.u32 %s280, 1
        %s1190 = smul.addr %s1189, 8
        %s1191 = scalar_lea.vmem [#allocation13], %s1190
        // Predicated region
        $region81: #{tpu_custom_call.1} parent=59 // pred_check
          %p1192 = pneg %p290
        $region82: #{tpu_custom_call.1} parent=59 // pred_check_branch
          %1194 = sbr.rel (%p1192) target = $region84
        $region83: #{tpu_custom_call.1} parent=59 // pred_region
          %s1196 = ssub.s32 128, 128
          %1197 = vsyncadd %s1188, %s1196
          %s1198 = sadd.s32 %s41, %s40
          %s1199 = smul.addr %s1198, 128
          %s1200 = scalar_lea.hbm %s11, %s1199
          %s1202 = sshll.u32 %s1191, 4
          %s1203 = int_to_ptr.vmem [resolvable:$true] %s1202
          %1205 = dma.vmem_to_hbm [thread:$0]  %s1203, 128, %s1200, %s1188
        $region84: #{tpu_custom_call.1} parent=59 // pred_fallthru
          _
      $region60: #{tpu_custom_call.1} parent=5 // pred_fallthru
        _
      %p1206 = scmp.le.s32.totalorder 2, %s31
      // Predicated region
      $region85: #{tpu_custom_call.1} parent=5 // pred_check
        %p1207 = pneg %p1206
      $region86: #{tpu_custom_call.1} parent=5 // pred_check_branch
        %1209 = sbr.rel (%p1207) target = $region88
      $region87: #{tpu_custom_call.1} parent=5 // pred_region
        %s1210 = ssub.s32 %s31, 2
        // Predicated region
        $region89: #{tpu_custom_call.1} parent=87 // pred_check
          %p1211 = pneg %p296
        $region90: #{tpu_custom_call.1} parent=87 // pred_check_branch
          %1213 = sbr.rel (%p1211) target = $region92
        $region91: #{tpu_custom_call.1} parent=87 // pred_region
          %s1214 = sand.u32 %s281, 1
          %s1215 = scalar_lea.sflag [#allocation6], %s1214
          %s1216 = sand.u32 %s281, 1
          %s1217 = smul.addr %s1216, 8
          %s1218 = scalar_lea.vmem [#allocation13], %s1217
          %1219 = dma.done %s1215, 128
        $region92: #{tpu_custom_call.1} parent=87 // pred_fallthru
          _
      $region88: #{tpu_custom_call.1} parent=5 // pred_fallthru
        _
    $region6: #{tpu_custom_call.1} parent=1 // loop_footer
      %s35 = sadd.s32 1, %s31
    $region7: #{tpu_custom_call.1} parent=1 // loop_footer_branch
      %30 = sbr.rel target = $region3
    $region8: #{tpu_custom_call.1} parent=1 // loop_exit
      _
    %1220 = vsyncpa [#allocation5], 1
    %s1221 = scalar_lea.sflag [#allocation5], 1
    %1222 = vsyncpa %s1221, 1
    %1223 = vsyncpa [#allocation8], 1
    %s1224 = scalar_lea.sflag [#allocation8], 1
    %1225 = vsyncpa %s1224, 1
    %1226 = vsyncpa [#allocation11], 1
    %1227 = vsyncpa [#allocation6], 1
    %s1228 = scalar_lea.sflag [#allocation6], 1
    %1229 = vsyncpa %s1228, 1

</llo_original>
